<compile_context>
chip_gen: v5e
topology: v5e:2x2
jax: 0.10.0
libtpu: 0.0.40
codegen_flags: <defaults>
</compile_context>

<pallas_src>
import functools

import jax
import jax.numpy as jnp
from jax.experimental import pallas as pl
from jax.experimental.pallas import tpu as pltpu


def _fused_lstm2_kernel(x_ref, wih0_ref, b0_ref, wa_ref, whh1_ref, b1_ref,
                        out_ref,
                        gx0_sc, rec0_sc, h0_sc, c0_sc, h1_sc, c1_sc,
                        *, hidden, chunk, bpad, unroll):
    """One grid step = one chunk of `chunk` time steps of BOTH LSTM layers.

    x_ref    : (CT*Bp, D)   time-major, batch-padded input chunk (bf16)
    wih0_ref : (D, 4H)      layer-0 input->gates weight (bf16, g cols pre-scaled x2)
    b0_ref   : (1, 4H)      layer-0 folded bias b_ih + b_hh (f32, g cols x2)
    wa_ref   : (H, 8H)      [W_hh0^T | W_ih1^T] stacked along N (bf16, g cols x2)
    whh1_ref : (H, 4H)      layer-1 hidden->gates weight (bf16, g cols x2)
    b1_ref   : (1, 4H)      layer-1 folded bias (f32, g cols x2)
    out_ref  : (CT*Bp, H)   layer-1 hidden states, time-major flat (f32)
    gx0_sc   : (CT*Bp, 4H)  scratch: layer-0 input-side gates for the chunk
    rec0_sc  : (Bp, 4H)     scratch: layer-0 recurrent-side gates for the NEXT step
    h0/c0/h1/c1_sc : (Bp,H) scratch: recurrent state, persists across chunks
    """
    H, CT, Bp = hidden, chunk, bpad

    @pl.when(pl.program_id(0) == 0)
    def _init():
        rec0_sc[...] = jnp.zeros_like(rec0_sc)
        h0_sc[...] = jnp.zeros_like(h0_sc)
        c0_sc[...] = jnp.zeros_like(c0_sc)
        h1_sc[...] = jnp.zeros_like(h1_sc)
        c1_sc[...] = jnp.zeros_like(c1_sc)

    # Phase 1: layer-0 input projection for the whole chunk in ONE GEMM
    # (M = CT*Bp rows) with the folded bias, so the recurrence has no per-step
    # bias broadcast and only recurrent matmuls on the serial critical path.
    gx0_sc[...] = (
        jnp.dot(x_ref[...], wih0_ref[...], preferred_element_type=jnp.float32)
        + b0_ref[...])

    w_a = wa_ref[...]        # (H, 8H)  weights loaded once per chunk
    w_hh1 = whh1_ref[...]    # (H, 4H)
    b_1 = b1_ref[...]        # (1, 4H)

    def gate_act(gates):
        # One full-width sigmoid for all four gates; the g columns were
        # pre-scaled by 2 in the wrapper, so tanh(g_raw) == 2*sigmoid(2*g_raw) - 1.
        s = jax.nn.sigmoid(gates)
        i = s[:, 0 * H:1 * H]
        f = s[:, 1 * H:2 * H]
        g = 2.0 * s[:, 2 * H:3 * H] - 1.0
        o = s[:, 3 * H:4 * H]
        return i, f, g, o

    def step(t, carry):
        h0, c0, h1, c1, rec0 = carry
        off = pl.multiple_of(t * Bp, Bp)

        # ---- layer-0 cell (its recurrent gates `rec0` were produced by the
        #      previous step's wavefront MXU push).
        g0 = gx0_sc[pl.ds(off, Bp), :] + rec0
        i0, f0, gg0, o0 = gate_act(g0)
        c0 = f0 * c0 + i0 * gg0
        h0 = o0 * jnp.tanh(c0)

        # ---- wavefront push keyed on h0_t: N = 8H = 256 columns produce BOTH
        #      layer-0's recurrent gates for step t+1 and layer-1's input gates
        #      for step t.  The small independent h1 push overlaps it.
        ga = jnp.dot(h0.astype(jnp.bfloat16), w_a,
                     preferred_element_type=jnp.float32)          # (Bp, 8H)
        gb = jnp.dot(h1.astype(jnp.bfloat16), w_hh1,
                     preferred_element_type=jnp.float32)          # (Bp, 4H)
        rec0_nxt = ga[:, :4 * H]

        # ---- layer-1 cell.
        g1 = ga[:, 4 * H:] + gb + b_1
        i1, f1, gg1, o1 = gate_act(g1)
        c1 = f1 * c1 + i1 * gg1
        h1 = o1 * jnp.tanh(c1)

        # Dense, sublane-aligned per-step store straight into the output block.
        out_ref[pl.ds(off, Bp), :] = h1.astype(out_ref.dtype)
        return h0, c0, h1, c1, rec0_nxt

    carry = (h0_sc[...], c0_sc[...], h1_sc[...], c1_sc[...], rec0_sc[...])
    h0, c0, h1, c1, rec0 = jax.lax.fori_loop(0, CT, step, carry, unroll=unroll)
    h0_sc[...] = h0
    c0_sc[...] = c0
    h1_sc[...] = h1
    c1_sc[...] = c1
    rec0_sc[...] = rec0


def _pick_chunk(T, max_chunk=64):
    """Largest divisor of T that is <= max_chunk (bounds scratch & compile time)."""
    for c in range(min(T, max_chunk), 0, -1):
        if T % c == 0:
            return c
    return T


def lstm_layer_forward(x, params, *, chunk=None):
    """Forward of LSTMLayer (eval mode).  x: (B, T, D) -> lstm_out: (B, T, H) f32."""
    # TODO(synk): training-mode dropout (input + inter-layer) not implemented;
    # both are identity in eval mode.  torch.mean(lstm_out, dim=1) is dead code
    # in the module (it returns lstm_out) and is omitted.
    B, T, D = x.shape
    H = params["whh0"].shape[1]                       # whh0: (4H, H)
    Bp = ((B + 7) // 8) * 8                           # sublane-aligned batch
    CT = _pick_chunk(T) if chunk is None else chunk
    assert T % CT == 0, "chunk must divide sequence length"

    def dg(a):   # pre-scale the g-gate block by 2 (exact in f32 and bf16)
        return a.at[..., 2 * H:3 * H].multiply(2.0)

    # Weight prep: bf16 MXU operands, biases folded and kept f32.
    wih0_t = dg(params["wih0"].T).astype(jnp.bfloat16)                  # (D, 4H)
    b0 = dg(params["bih0"] + params["bhh0"])[None, :]                   # (1, 4H)
    w_a = jnp.concatenate([dg(params["whh0"].T), dg(params["wih1"].T)],
                          axis=1).astype(jnp.bfloat16)                  # (H, 8H)
    whh1_t = dg(params["whh1"].T).astype(jnp.bfloat16)                  # (H, 4H)
    b1 = dg(params["bih1"] + params["bhh1"])[None, :]                   # (1, 4H)

    # Layout prep (once, in XLA, outside the kernel): pad batch to a multiple of
    # 8 sublanes and flatten time-major so every per-step slice inside the
    # kernel is a dense aligned (Bp, .) block.
    xp = jnp.pad(x, ((0, Bp - B), (0, 0), (0, 0)))                      # (Bp, T, D)
    x_tm = jnp.transpose(xp, (1, 0, 2)).reshape(T * Bp, D).astype(jnp.bfloat16)

    kernel = functools.partial(_fused_lstm2_kernel, hidden=H, chunk=CT,
                               bpad=Bp, unroll=min(CT, 8))

    # VMEM note: per-chunk footprint ~= CT*Bp*4H*4 B (gx0) + CT*Bp*H*4 B (out
    # block) + double-buffered x chunk + resident weights; CT is capped at 64 so
    # this stays well inside the default scoped VMEM on v5e/v6e/v7x.
    out_tm = pl.pallas_call(
        kernel,
        out_shape=jax.ShapeDtypeStruct((T * Bp, H), jnp.float32),
        grid=(T // CT,),
        in_specs=[
            pl.BlockSpec((CT * Bp, D), lambda n: (n, 0)),   # x chunk (time-major)
            pl.BlockSpec((D, 4 * H), lambda n: (0, 0)),     # W_ih0^T    (resident)
            pl.BlockSpec((1, 4 * H), lambda n: (0, 0)),     # folded bias0
            pl.BlockSpec((H, 8 * H), lambda n: (0, 0)),     # [W_hh0^T | W_ih1^T]
            pl.BlockSpec((H, 4 * H), lambda n: (0, 0)),     # W_hh1^T    (resident)
            pl.BlockSpec((1, 4 * H), lambda n: (0, 0)),     # folded bias1
        ],
        out_specs=pl.BlockSpec((CT * Bp, H), lambda n: (n, 0)),
        scratch_shapes=[
            pltpu.VMEM((CT * Bp, 4 * H), jnp.float32),   # gx0: layer-0 input gates
            pltpu.VMEM((Bp, 4 * H), jnp.float32),        # rec0: wavefront carry
            pltpu.VMEM((Bp, H), jnp.float32),            # h0
            pltpu.VMEM((Bp, H), jnp.float32),            # c0
            pltpu.VMEM((Bp, H), jnp.float32),            # h1
            pltpu.VMEM((Bp, H), jnp.float32),            # c1
        ],
        compiler_params=pltpu.CompilerParams(
            dimension_semantics=("arbitrary",)),   # time chunks are sequential
        # TODO(synk): for large B on v7x, add a leading "parallel" batch-shard
        # grid axis so both TensorCores are used; a lane-dense (B, T*H) output
        # for H < 128 would need an in-kernel sublane->lane repack (skipped).
    )(x_tm, wih0_t, b0, w_a, whh1_t, b1)

    # Back to batch-first (B, T, H); drop batch padding.  One cheap XLA pass.
    return jnp.transpose(out_tm.reshape(T, Bp, H)[:, :B, :], (1, 0, 2))


def _reference_lstm(x, params, matmul_dtype=jnp.bfloat16):
    """Pure-JAX reference (lax.scan) mirroring PyTorch nn.LSTM, 2 layers.

    Matmul operands are cast to `matmul_dtype` (f32 accumulation) to match the
    kernel's MXU precision choice; gate math / states stay f32.
    """
    B, T, D = x.shape
    H = params["whh0"].shape[1]

    def mm(a, b):
        return jnp.dot(a.astype(matmul_dtype), b.astype(matmul_dtype),
                       preferred_element_type=jnp.float32)

    def cell(x_t, h, c, w_ih, w_hh, b_ih, b_hh):
        gates = mm(x_t, w_ih.T) + mm(h, w_hh.T) + b_ih + b_hh
        i, f, g, o = jnp.split(gates, 4, axis=-1)
        i, f, o = jax.nn.sigmoid(i), jax.nn.sigmoid(f), jax.nn.sigmoid(o)
        g = jnp.tanh(g)
        c_new = f * c + i * g
        return o * jnp.tanh(c_new), c_new

    def step(carry, x_t):
        h0, c0, h1, c1 = carry
        h0, c0 = cell(x_t, h0, c0, params["wih0"], params["whh0"],
                      params["bih0"], params["bhh0"])
        h1, c1 = cell(h0, h1, c1, params["wih1"], params["whh1"],
                      params["bih1"], params["bhh1"])
        return (h0, c0, h1, c1), h1

    z = jnp.zeros((B, H), jnp.float32)
    _, ys = jax.lax.scan(step, (z, z, z, z), jnp.transpose(x, (1, 0, 2)))
    return jnp.transpose(ys, (1, 0, 2))


def _init_params(key, D, H):
    """Deterministic init, PyTorch-style uniform(-1/sqrt(H), 1/sqrt(H))."""
    k = 1.0 / jnp.sqrt(jnp.float32(H))
    names_shapes = [
        ("wih0", (4 * H, D)), ("whh0", (4 * H, H)),
        ("bih0", (4 * H,)), ("bhh0", (4 * H,)),
        ("wih1", (4 * H, H)), ("whh1", (4 * H, H)),
        ("bih1", (4 * H,)), ("bhh1", (4 * H,)),
    ]
    keys = jax.random.split(key, len(names_shapes))
    return {name: jax.random.uniform(kk, shape, jnp.float32, -k, k)
            for kk, (name, shape) in zip(keys, names_shapes)}


if __name__ == "__main__":
    B, T, D, H = 4, 8, 32, 32   # batch, seq_len, vocab_dim, lstm_hidden_dim
    key = jax.random.PRNGKey(0)
    kx, kp = jax.random.split(key)
    x = jax.random.normal(kx, (B, T, D), jnp.float32)     # pooled_emb (B, T, D)
    params = _init_params(kp, D, H)

    out = jax.block_until_ready(jax.jit(lstm_layer_forward)(x, params))
    ref = _reference_lstm(x, params)    # same bf16-operand matmul precision

    assert out.shape == (B, T, H), out.shape
    assert jnp.allclose(out, ref, atol=5e-3, rtol=5e-3), (
        "mismatch vs reference, max abs err = "
        f"{float(jnp.max(jnp.abs(out - ref)))}")
    print("KERNEL_OK")
</pallas_src>

<mosaic_0001>
module attributes {stable_mosaic.version = 11 : i64} {
  func.func @_fused_lstm2_kernel(%arg0: i32, %arg1: memref<64x32xbf16, #tpu.memory_space<vmem>>, %arg2: memref<32x128xbf16, #tpu.memory_space<vmem>>, %arg3: memref<1x128xf32, #tpu.memory_space<vmem>>, %arg4: memref<32x256xbf16, #tpu.memory_space<vmem>>, %arg5: memref<32x128xbf16, #tpu.memory_space<vmem>>, %arg6: memref<1x128xf32, #tpu.memory_space<vmem>>, %arg7: memref<64x32xf32, #tpu.memory_space<vmem>>, %arg8: memref<64x128xf32, #tpu.memory_space<vmem>>, %arg9: memref<8x128xf32, #tpu.memory_space<vmem>>, %arg10: memref<8x32xf32, #tpu.memory_space<vmem>>, %arg11: memref<8x32xf32, #tpu.memory_space<vmem>>, %arg12: memref<8x32xf32, #tpu.memory_space<vmem>>, %arg13: memref<8x32xf32, #tpu.memory_space<vmem>>) attributes {dimension_semantics = [#tpu.dimension_semantics<arbitrary>], iteration_bounds = array<i64: 1>, scalar_prefetch = 0 : i64, scratch_operands = 6 : i64, tpu.core_type = #tpu.core_type<tc>, window_params = [{transform_indices = @transform_0, window_bounds = array<i64: 64, 32>}, {pipeline_mode = #tpu.pipeline_mode<synchronous>, transform_indices = @transform_1, window_bounds = array<i64: 32, 128>}, {pipeline_mode = #tpu.pipeline_mode<synchronous>, transform_indices = @transform_2, window_bounds = array<i64: 1, 128>}, {pipeline_mode = #tpu.pipeline_mode<synchronous>, transform_indices = @transform_3, window_bounds = array<i64: 32, 256>}, {pipeline_mode = #tpu.pipeline_mode<synchronous>, transform_indices = @transform_4, window_bounds = array<i64: 32, 128>}, {pipeline_mode = #tpu.pipeline_mode<synchronous>, transform_indices = @transform_5, window_bounds = array<i64: 1, 128>}, {transform_indices = @transform_6, window_bounds = array<i64: 64, 32>}]} {
    %c0_i32 = arith.constant 0 : i32
    %0 = arith.cmpi eq, %arg0, %c0_i32 : i32
    %1 = arith.extui %0 : i1 to i32
    %c0_i32_0 = arith.constant 0 : i32
    %2 = arith.cmpi ne, %1, %c0_i32_0 : i32
    scf.if %2 {
      %cst_123 = arith.constant 0.000000e+00 : f32
      %439 = vector.broadcast %cst_123 : f32 to vector<8x128xf32>
      %c0_124 = arith.constant 0 : index
      %c0_125 = arith.constant 0 : index
      %440 = vector.load %arg9[%c0_124, %c0_125] : memref<8x128xf32, #tpu.memory_space<vmem>>, vector<8x128xf32>
      tpu.vector_store %arg9[%c0_124, %c0_125], %439 {strides = array<i32>} : memref<8x128xf32, #tpu.memory_space<vmem>>, vector<8x128xf32>,
      %cst_126 = arith.constant 0.000000e+00 : f32
      %441 = vector.broadcast %cst_126 : f32 to vector<8x32xf32>
      %c0_127 = arith.constant 0 : index
      %c0_128 = arith.constant 0 : index
      %442 = vector.load %arg10[%c0_127, %c0_128] : memref<8x32xf32, #tpu.memory_space<vmem>>, vector<8x32xf32>
      tpu.vector_store %arg10[%c0_127, %c0_128], %441 {strides = array<i32>} : memref<8x32xf32, #tpu.memory_space<vmem>>, vector<8x32xf32>,
      %cst_129 = arith.constant 0.000000e+00 : f32
      %443 = vector.broadcast %cst_129 : f32 to vector<8x32xf32>
      %c0_130 = arith.constant 0 : index
      %c0_131 = arith.constant 0 : index
      %444 = vector.load %arg11[%c0_130, %c0_131] : memref<8x32xf32, #tpu.memory_space<vmem>>, vector<8x32xf32>
      tpu.vector_store %arg11[%c0_130, %c0_131], %443 {strides = array<i32>} : memref<8x32xf32, #tpu.memory_space<vmem>>, vector<8x32xf32>,
      %cst_132 = arith.constant 0.000000e+00 : f32
      %445 = vector.broadcast %cst_132 : f32 to vector<8x32xf32>
      %c0_133 = arith.constant 0 : index
      %c0_134 = arith.constant 0 : index
      %446 = vector.load %arg12[%c0_133, %c0_134] : memref<8x32xf32, #tpu.memory_space<vmem>>, vector<8x32xf32>
      tpu.vector_store %arg12[%c0_133, %c0_134], %445 {strides = array<i32>} : memref<8x32xf32, #tpu.memory_space<vmem>>, vector<8x32xf32>,
      %cst_135 = arith.constant 0.000000e+00 : f32
      %447 = vector.broadcast %cst_135 : f32 to vector<8x32xf32>
      %c0_136 = arith.constant 0 : index
      %c0_137 = arith.constant 0 : index
      %448 = vector.load %arg13[%c0_136, %c0_137] : memref<8x32xf32, #tpu.memory_space<vmem>>, vector<8x32xf32>
      tpu.vector_store %arg13[%c0_136, %c0_137], %447 {strides = array<i32>} : memref<8x32xf32, #tpu.memory_space<vmem>>, vector<8x32xf32>,
    } else {
    }
    %c0 = arith.constant 0 : index
    %c0_1 = arith.constant 0 : index
    %3 = vector.load %arg1[%c0, %c0_1] : memref<64x32xbf16, #tpu.memory_space<vmem>>, vector<64x32xbf16>
    %c0_2 = arith.constant 0 : index
    %c0_3 = arith.constant 0 : index
    %4 = vector.load %arg2[%c0_2, %c0_3] : memref<32x128xbf16, #tpu.memory_space<vmem>>, vector<32x128xbf16>
    %cst = arith.constant dense<0.000000e+00> : vector<64x128xf32>
    %5 = tpu.matmul %3, %4, %cst {dimension_numbers = #tpu.dot_dimension_numbers<[1], [0], [0], [1], [0, 0, 1, 1], [], []>} : vector<64x32xbf16>, vector<32x128xbf16>, vector<64x128xf32> -> vector<64x128xf32>
    %c0_4 = arith.constant 0 : index
    %c0_5 = arith.constant 0 : index
    %6 = vector.load %arg3[%c0_4, %c0_5] : memref<1x128xf32, #tpu.memory_space<vmem>>, vector<1x128xf32>
    %7 = vector.broadcast %6 : vector<1x128xf32> to vector<64x128xf32>
    %8 = arith.addf %5, %7 : vector<64x128xf32>
    %c0_6 = arith.constant 0 : index
    %c0_7 = arith.constant 0 : index
    %9 = vector.load %arg8[%c0_6, %c0_7] : memref<64x128xf32, #tpu.memory_space<vmem>>, vector<64x128xf32>
    tpu.vector_store %arg8[%c0_6, %c0_7], %8 {strides = array<i32>} : memref<64x128xf32, #tpu.memory_space<vmem>>, vector<64x128xf32>,
    %c0_8 = arith.constant 0 : index
    %c0_9 = arith.constant 0 : index
    %10 = vector.load %arg4[%c0_8, %c0_9] : memref<32x256xbf16, #tpu.memory_space<vmem>>, vector<32x256xbf16>
    %c0_10 = arith.constant 0 : index
    %c0_11 = arith.constant 0 : index
    %11 = vector.load %arg5[%c0_10, %c0_11] : memref<32x128xbf16, #tpu.memory_space<vmem>>, vector<32x128xbf16>
    %c0_12 = arith.constant 0 : index
    %c0_13 = arith.constant 0 : index
    %12 = vector.load %arg6[%c0_12, %c0_13] : memref<1x128xf32, #tpu.memory_space<vmem>>, vector<1x128xf32>
    %c0_14 = arith.constant 0 : index
    %c0_15 = arith.constant 0 : index
    %13 = vector.load %arg10[%c0_14, %c0_15] : memref<8x32xf32, #tpu.memory_space<vmem>>, vector<8x32xf32>
    %c0_16 = arith.constant 0 : index
    %c0_17 = arith.constant 0 : index
    %14 = vector.load %arg11[%c0_16, %c0_17] : memref<8x32xf32, #tpu.memory_space<vmem>>, vector<8x32xf32>
    %c0_18 = arith.constant 0 : index
    %c0_19 = arith.constant 0 : index
    %15 = vector.load %arg12[%c0_18, %c0_19] : memref<8x32xf32, #tpu.memory_space<vmem>>, vector<8x32xf32>
    %c0_20 = arith.constant 0 : index
    %c0_21 = arith.constant 0 : index
    %16 = vector.load %arg13[%c0_20, %c0_21] : memref<8x32xf32, #tpu.memory_space<vmem>>, vector<8x32xf32>
    %c0_22 = arith.constant 0 : index
    %c0_23 = arith.constant 0 : index
    %17 = vector.load %arg9[%c0_22, %c0_23] : memref<8x128xf32, #tpu.memory_space<vmem>>, vector<8x128xf32>
    %c0_i32_24 = arith.constant 0 : i32
    %c8_i32 = arith.constant 8 : i32
    %18 = arith.muli %c0_i32_24, %c8_i32 : i32
    %19 = tpu.assume_multiple %18, 8 : i32
    %20 = arith.index_cast %19 : i32 to index
    %c0_25 = arith.constant 0 : index
    %21 = vector.load %arg8[%20, %c0_25] : memref<64x128xf32, #tpu.memory_space<vmem>>, vector<8x128xf32>
    %22 = arith.addf %21, %17 : vector<8x128xf32>
    %23 = arith.negf %22 : vector<8x128xf32>
    %24 = math.exp %23 : vector<8x128xf32>
    %cst_26 = arith.constant 1.000000e+00 : f32
    %25 = vector.broadcast %cst_26 : f32 to vector<8x128xf32>
    %26 = arith.addf %25, %24 : vector<8x128xf32>
    %27 = arith.divf %25, %26 : vector<8x128xf32>
    %28 = vector.extract_strided_slice %27 {offsets = [0, 0], sizes = [8, 32], strides = [1, 1]} : vector<8x128xf32> to vector<8x32xf32>
    %29 = vector.extract_strided_slice %27 {offsets = [0, 32], sizes = [8, 32], strides = [1, 1]} : vector<8x128xf32> to vector<8x32xf32>
    %30 = vector.extract_strided_slice %27 {offsets = [0, 64], sizes = [8, 32], strides = [1, 1]} : vector<8x128xf32> to vector<8x32xf32>
    %cst_27 = arith.constant 2.000000e+00 : f32
    %31 = vector.broadcast %cst_27 : f32 to vector<8x32xf32>
    %32 = arith.mulf %31, %30 : vector<8x32xf32>
    %cst_28 = arith.constant 1.000000e+00 : f32
    %33 = vector.broadcast %cst_28 : f32 to vector<8x32xf32>
    %34 = arith.subf %32, %33 : vector<8x32xf32>
    %35 = vector.extract_strided_slice %27 {offsets = [0, 96], sizes = [8, 32], strides = [1, 1]} : vector<8x128xf32> to vector<8x32xf32>
    %36 = arith.mulf %29, %14 : vector<8x32xf32>
    %37 = arith.mulf %28, %34 : vector<8x32xf32>
    %38 = arith.addf %36, %37 : vector<8x32xf32>
    %39 = math.tanh %38 : vector<8x32xf32>
    %40 = arith.mulf %35, %39 : vector<8x32xf32>
    %41 = arith.truncf %40 : vector<8x32xf32> to vector<8x32xbf16>
    %cst_29 = arith.constant dense<0.000000e+00> : vector<8x256xf32>
    %42 = tpu.matmul %41, %10, %cst_29 {dimension_numbers = #tpu.dot_dimension_numbers<[1], [0], [0], [1], [0, 0, 1, 1], [], []>} : vector<8x32xbf16>, vector<32x256xbf16>, vector<8x256xf32> -> vector<8x256xf32>
    %43 = arith.truncf %15 : vector<8x32xf32> to vector<8x32xbf16>
    %cst_30 = arith.constant dense<0.000000e+00> : vector<8x128xf32>
    %44 = tpu.matmul %43, %11, %cst_30 {dimension_numbers = #tpu.dot_dimension_numbers<[1], [0], [0], [1], [0, 0, 1, 1], [], []>} : vector<8x32xbf16>, vector<32x128xbf16>, vector<8x128xf32> -> vector<8x128xf32>
    %45 = vector.extract_strided_slice %42 {offsets = [0, 0], sizes = [8, 128], strides = [1, 1]} : vector<8x256xf32> to vector<8x128xf32>
    %46 = vector.extract_strided_slice %42 {offsets = [0, 128], sizes = [8, 128], strides = [1, 1]} : vector<8x256xf32> to vector<8x128xf32>
    %47 = arith.addf %46, %44 : vector<8x128xf32>
    %48 = vector.broadcast %12 : vector<1x128xf32> to vector<8x128xf32>
    %49 = arith.addf %47, %48 : vector<8x128xf32>
    %50 = arith.negf %49 : vector<8x128xf32>
    %51 = math.exp %50 : vector<8x128xf32>
    %cst_31 = arith.constant 1.000000e+00 : f32
    %52 = vector.broadcast %cst_31 : f32 to vector<8x128xf32>
    %53 = arith.addf %52, %51 : vector<8x128xf32>
    %54 = arith.divf %52, %53 : vector<8x128xf32>
    %55 = vector.extract_strided_slice %54 {offsets = [0, 0], sizes = [8, 32], strides = [1, 1]} : vector<8x128xf32> to vector<8x32xf32>
    %56 = vector.extract_strided_slice %54 {offsets = [0, 32], sizes = [8, 32], strides = [1, 1]} : vector<8x128xf32> to vector<8x32xf32>
    %57 = vector.extract_strided_slice %54 {offsets = [0, 64], sizes = [8, 32], strides = [1, 1]} : vector<8x128xf32> to vector<8x32xf32>
    %cst_32 = arith.constant 2.000000e+00 : f32
    %58 = vector.broadcast %cst_32 : f32 to vector<8x32xf32>
    %59 = arith.mulf %58, %57 : vector<8x32xf32>
    %cst_33 = arith.constant 1.000000e+00 : f32
    %60 = vector.broadcast %cst_33 : f32 to vector<8x32xf32>
    %61 = arith.subf %59, %60 : vector<8x32xf32>
    %62 = vector.extract_strided_slice %54 {offsets = [0, 96], sizes = [8, 32], strides = [1, 1]} : vector<8x128xf32> to vector<8x32xf32>
    %63 = arith.mulf %56, %16 : vector<8x32xf32>
    %64 = arith.mulf %55, %61 : vector<8x32xf32>
    %65 = arith.addf %63, %64 : vector<8x32xf32>
    %66 = math.tanh %65 : vector<8x32xf32>
    %67 = arith.mulf %62, %66 : vector<8x32xf32>
    %68 = arith.index_cast %19 : i32 to index
    %c0_34 = arith.constant 0 : index
    %69 = vector.load %arg7[%68, %c0_34] : memref<64x32xf32, #tpu.memory_space<vmem>>, vector<8x32xf32>
    tpu.vector_store %arg7[%68, %c0_34], %67 {strides = array<i32>} : memref<64x32xf32, #tpu.memory_space<vmem>>, vector<8x32xf32>,
    %c1_i32 = arith.constant 1 : i32
    %c8_i32_35 = arith.constant 8 : i32
    %70 = arith.muli %c1_i32, %c8_i32_35 : i32
    %71 = tpu.assume_multiple %70, 8 : i32
    %72 = arith.index_cast %71 : i32 to index
    %c0_36 = arith.constant 0 : index
    %73 = vector.load %arg8[%72, %c0_36] : memref<64x128xf32, #tpu.memory_space<vmem>>, vector<8x128xf32>
    %74 = arith.addf %73, %45 : vector<8x128xf32>
    %75 = arith.negf %74 : vector<8x128xf32>
    %76 = math.exp %75 : vector<8x128xf32>
    %cst_37 = arith.constant 1.000000e+00 : f32
    %77 = vector.broadcast %cst_37 : f32 to vector<8x128xf32>
    %78 = arith.addf %77, %76 : vector<8x128xf32>
    %79 = arith.divf %77, %78 : vector<8x128xf32>
    %80 = vector.extract_strided_slice %79 {offsets = [0, 0], sizes = [8, 32], strides = [1, 1]} : vector<8x128xf32> to vector<8x32xf32>
    %81 = vector.extract_strided_slice %79 {offsets = [0, 32], sizes = [8, 32], strides = [1, 1]} : vector<8x128xf32> to vector<8x32xf32>
    %82 = vector.extract_strided_slice %79 {offsets = [0, 64], sizes = [8, 32], strides = [1, 1]} : vector<8x128xf32> to vector<8x32xf32>
    %cst_38 = arith.constant 2.000000e+00 : f32
    %83 = vector.broadcast %cst_38 : f32 to vector<8x32xf32>
    %84 = arith.mulf %83, %82 : vector<8x32xf32>
    %cst_39 = arith.constant 1.000000e+00 : f32
    %85 = vector.broadcast %cst_39 : f32 to vector<8x32xf32>
    %86 = arith.subf %84, %85 : vector<8x32xf32>
    %87 = vector.extract_strided_slice %79 {offsets = [0, 96], sizes = [8, 32], strides = [1, 1]} : vector<8x128xf32> to vector<8x32xf32>
    %88 = arith.mulf %81, %38 : vector<8x32xf32>
    %89 = arith.mulf %80, %86 : vector<8x32xf32>
    %90 = arith.addf %88, %89 : vector<8x32xf32>
    %91 = math.tanh %90 : vector<8x32xf32>
    %92 = arith.mulf %87, %91 : vector<8x32xf32>
    %93 = arith.truncf %92 : vector<8x32xf32> to vector<8x32xbf16>
    %cst_40 = arith.constant dense<0.000000e+00> : vector<8x256xf32>
    %94 = tpu.matmul %93, %10, %cst_40 {dimension_numbers = #tpu.dot_dimension_numbers<[1], [0], [0], [1], [0, 0, 1, 1], [], []>} : vector<8x32xbf16>, vector<32x256xbf16>, vector<8x256xf32> -> vector<8x256xf32>
    %95 = arith.truncf %67 : vector<8x32xf32> to vector<8x32xbf16>
    %cst_41 = arith.constant dense<0.000000e+00> : vector<8x128xf32>
    %96 = tpu.matmul %95, %11, %cst_41 {dimension_numbers = #tpu.dot_dimension_numbers<[1], [0], [0], [1], [0, 0, 1, 1], [], []>} : vector<8x32xbf16>, vector<32x128xbf16>, vector<8x128xf32> -> vector<8x128xf32>
    %97 = vector.extract_strided_slice %94 {offsets = [0, 0], sizes = [8, 128], strides = [1, 1]} : vector<8x256xf32> to vector<8x128xf32>
    %98 = vector.extract_strided_slice %94 {offsets = [0, 128], sizes = [8, 128], strides = [1, 1]} : vector<8x256xf32> to vector<8x128xf32>
    %99 = arith.addf %98, %96 : vector<8x128xf32>
    %100 = vector.broadcast %12 : vector<1x128xf32> to vector<8x128xf32>
    %101 = arith.addf %99, %100 : vector<8x128xf32>
    %102 = arith.negf %101 : vector<8x128xf32>
    %103 = math.exp %102 : vector<8x128xf32>
    %cst_42 = arith.constant 1.000000e+00 : f32
    %104 = vector.broadcast %cst_42 : f32 to vector<8x128xf32>
    %105 = arith.addf %104, %103 : vector<8x128xf32>
    %106 = arith.divf %104, %105 : vector<8x128xf32>
    %107 = vector.extract_strided_slice %106 {offsets = [0, 0], sizes = [8, 32], strides = [1, 1]} : vector<8x128xf32> to vector<8x32xf32>
    %108 = vector.extract_strided_slice %106 {offsets = [0, 32], sizes = [8, 32], strides = [1, 1]} : vector<8x128xf32> to vector<8x32xf32>
    %109 = vector.extract_strided_slice %106 {offsets = [0, 64], sizes = [8, 32], strides = [1, 1]} : vector<8x128xf32> to vector<8x32xf32>
    %cst_43 = arith.constant 2.000000e+00 : f32
    %110 = vector.broadcast %cst_43 : f32 to vector<8x32xf32>
    %111 = arith.mulf %110, %109 : vector<8x32xf32>
    %cst_44 = arith.constant 1.000000e+00 : f32
    %112 = vector.broadcast %cst_44 : f32 to vector<8x32xf32>
    %113 = arith.subf %111, %112 : vector<8x32xf32>
    %114 = vector.extract_strided_slice %106 {offsets = [0, 96], sizes = [8, 32], strides = [1, 1]} : vector<8x128xf32> to vector<8x32xf32>
    %115 = arith.mulf %108, %65 : vector<8x32xf32>
    %116 = arith.mulf %107, %113 : vector<8x32xf32>
    %117 = arith.addf %115, %116 : vector<8x32xf32>
    %118 = math.tanh %117 : vector<8x32xf32>
    %119 = arith.mulf %114, %118 : vector<8x32xf32>
    %120 = arith.index_cast %71 : i32 to index
    %c0_45 = arith.constant 0 : index
    %121 = vector.load %arg7[%120, %c0_45] : memref<64x32xf32, #tpu.memory_space<vmem>>, vector<8x32xf32>
    tpu.vector_store %arg7[%120, %c0_45], %119 {strides = array<i32>} : memref<64x32xf32, #tpu.memory_space<vmem>>, vector<8x32xf32>,
    %c2_i32 = arith.constant 2 : i32
    %c8_i32_46 = arith.constant 8 : i32
    %122 = arith.muli %c2_i32, %c8_i32_46 : i32
    %123 = tpu.assume_multiple %122, 8 : i32
    %124 = arith.index_cast %123 : i32 to index
    %c0_47 = arith.constant 0 : index
    %125 = vector.load %arg8[%124, %c0_47] : memref<64x128xf32, #tpu.memory_space<vmem>>, vector<8x128xf32>
    %126 = arith.addf %125, %97 : vector<8x128xf32>
    %127 = arith.negf %126 : vector<8x128xf32>
    %128 = math.exp %127 : vector<8x128xf32>
    %cst_48 = arith.constant 1.000000e+00 : f32
    %129 = vector.broadcast %cst_48 : f32 to vector<8x128xf32>
    %130 = arith.addf %129, %128 : vector<8x128xf32>
    %131 = arith.divf %129, %130 : vector<8x128xf32>
    %132 = vector.extract_strided_slice %131 {offsets = [0, 0], sizes = [8, 32], strides = [1, 1]} : vector<8x128xf32> to vector<8x32xf32>
    %133 = vector.extract_strided_slice %131 {offsets = [0, 32], sizes = [8, 32], strides = [1, 1]} : vector<8x128xf32> to vector<8x32xf32>
    %134 = vector.extract_strided_slice %131 {offsets = [0, 64], sizes = [8, 32], strides = [1, 1]} : vector<8x128xf32> to vector<8x32xf32>
    %cst_49 = arith.constant 2.000000e+00 : f32
    %135 = vector.broadcast %cst_49 : f32 to vector<8x32xf32>
    %136 = arith.mulf %135, %134 : vector<8x32xf32>
    %cst_50 = arith.constant 1.000000e+00 : f32
    %137 = vector.broadcast %cst_50 : f32 to vector<8x32xf32>
    %138 = arith.subf %136, %137 : vector<8x32xf32>
    %139 = vector.extract_strided_slice %131 {offsets = [0, 96], sizes = [8, 32], strides = [1, 1]} : vector<8x128xf32> to vector<8x32xf32>
    %140 = arith.mulf %133, %90 : vector<8x32xf32>
    %141 = arith.mulf %132, %138 : vector<8x32xf32>
    %142 = arith.addf %140, %141 : vector<8x32xf32>
    %143 = math.tanh %142 : vector<8x32xf32>
    %144 = arith.mulf %139, %143 : vector<8x32xf32>
    %145 = arith.truncf %144 : vector<8x32xf32> to vector<8x32xbf16>
    %cst_51 = arith.constant dense<0.000000e+00> : vector<8x256xf32>
    %146 = tpu.matmul %145, %10, %cst_51 {dimension_numbers = #tpu.dot_dimension_numbers<[1], [0], [0], [1], [0, 0, 1, 1], [], []>} : vector<8x32xbf16>, vector<32x256xbf16>, vector<8x256xf32> -> vector<8x256xf32>
    %147 = arith.truncf %119 : vector<8x32xf32> to vector<8x32xbf16>
    %cst_52 = arith.constant dense<0.000000e+00> : vector<8x128xf32>
    %148 = tpu.matmul %147, %11, %cst_52 {dimension_numbers = #tpu.dot_dimension_numbers<[1], [0], [0], [1], [0, 0, 1, 1], [], []>} : vector<8x32xbf16>, vector<32x128xbf16>, vector<8x128xf32> -> vector<8x128xf32>
    %149 = vector.extract_strided_slice %146 {offsets = [0, 0], sizes = [8, 128], strides = [1, 1]} : vector<8x256xf32> to vector<8x128xf32>
    %150 = vector.extract_strided_slice %146 {offsets = [0, 128], sizes = [8, 128], strides = [1, 1]} : vector<8x256xf32> to vector<8x128xf32>
    %151 = arith.addf %150, %148 : vector<8x128xf32>
    %152 = vector.broadcast %12 : vector<1x128xf32> to vector<8x128xf32>
    %153 = arith.addf %151, %152 : vector<8x128xf32>
    %154 = arith.negf %153 : vector<8x128xf32>
    %155 = math.exp %154 : vector<8x128xf32>
    %cst_53 = arith.constant 1.000000e+00 : f32
    %156 = vector.broadcast %cst_53 : f32 to vector<8x128xf32>
    %157 = arith.addf %156, %155 : vector<8x128xf32>
    %158 = arith.divf %156, %157 : vector<8x128xf32>
    %159 = vector.extract_strided_slice %158 {offsets = [0, 0], sizes = [8, 32], strides = [1, 1]} : vector<8x128xf32> to vector<8x32xf32>
    %160 = vector.extract_strided_slice %158 {offsets = [0, 32], sizes = [8, 32], strides = [1, 1]} : vector<8x128xf32> to vector<8x32xf32>
    %161 = vector.extract_strided_slice %158 {offsets = [0, 64], sizes = [8, 32], strides = [1, 1]} : vector<8x128xf32> to vector<8x32xf32>
    %cst_54 = arith.constant 2.000000e+00 : f32
    %162 = vector.broadcast %cst_54 : f32 to vector<8x32xf32>
    %163 = arith.mulf %162, %161 : vector<8x32xf32>
    %cst_55 = arith.constant 1.000000e+00 : f32
    %164 = vector.broadcast %cst_55 : f32 to vector<8x32xf32>
    %165 = arith.subf %163, %164 : vector<8x32xf32>
    %166 = vector.extract_strided_slice %158 {offsets = [0, 96], sizes = [8, 32], strides = [1, 1]} : vector<8x128xf32> to vector<8x32xf32>
    %167 = arith.mulf %160, %117 : vector<8x32xf32>
    %168 = arith.mulf %159, %165 : vector<8x32xf32>
    %169 = arith.addf %167, %168 : vector<8x32xf32>
    %170 = math.tanh %169 : vector<8x32xf32>
    %171 = arith.mulf %166, %170 : vector<8x32xf32>
    %172 = arith.index_cast %123 : i32 to index
    %c0_56 = arith.constant 0 : index
    %173 = vector.load %arg7[%172, %c0_56] : memref<64x32xf32, #tpu.memory_space<vmem>>, vector<8x32xf32>
    tpu.vector_store %arg7[%172, %c0_56], %171 {strides = array<i32>} : memref<64x32xf32, #tpu.memory_space<vmem>>, vector<8x32xf32>,
    %c3_i32 = arith.constant 3 : i32
    %c8_i32_57 = arith.constant 8 : i32
    %174 = arith.muli %c3_i32, %c8_i32_57 : i32
    %175 = tpu.assume_multiple %174, 8 : i32
    %176 = arith.index_cast %175 : i32 to index
    %c0_58 = arith.constant 0 : index
    %177 = vector.load %arg8[%176, %c0_58] : memref<64x128xf32, #tpu.memory_space<vmem>>, vector<8x128xf32>
    %178 = arith.addf %177, %149 : vector<8x128xf32>
    %179 = arith.negf %178 : vector<8x128xf32>
    %180 = math.exp %179 : vector<8x128xf32>
    %cst_59 = arith.constant 1.000000e+00 : f32
    %181 = vector.broadcast %cst_59 : f32 to vector<8x128xf32>
    %182 = arith.addf %181, %180 : vector<8x128xf32>
    %183 = arith.divf %181, %182 : vector<8x128xf32>
    %184 = vector.extract_strided_slice %183 {offsets = [0, 0], sizes = [8, 32], strides = [1, 1]} : vector<8x128xf32> to vector<8x32xf32>
    %185 = vector.extract_strided_slice %183 {offsets = [0, 32], sizes = [8, 32], strides = [1, 1]} : vector<8x128xf32> to vector<8x32xf32>
    %186 = vector.extract_strided_slice %183 {offsets = [0, 64], sizes = [8, 32], strides = [1, 1]} : vector<8x128xf32> to vector<8x32xf32>
    %cst_60 = arith.constant 2.000000e+00 : f32
    %187 = vector.broadcast %cst_60 : f32 to vector<8x32xf32>
    %188 = arith.mulf %187, %186 : vector<8x32xf32>
    %cst_61 = arith.constant 1.000000e+00 : f32
    %189 = vector.broadcast %cst_61 : f32 to vector<8x32xf32>
    %190 = arith.subf %188, %189 : vector<8x32xf32>
    %191 = vector.extract_strided_slice %183 {offsets = [0, 96], sizes = [8, 32], strides = [1, 1]} : vector<8x128xf32> to vector<8x32xf32>
    %192 = arith.mulf %185, %142 : vector<8x32xf32>
    %193 = arith.mulf %184, %190 : vector<8x32xf32>
    %194 = arith.addf %192, %193 : vector<8x32xf32>
    %195 = math.tanh %194 : vector<8x32xf32>
    %196 = arith.mulf %191, %195 : vector<8x32xf32>
    %197 = arith.truncf %196 : vector<8x32xf32> to vector<8x32xbf16>
    %cst_62 = arith.constant dense<0.000000e+00> : vector<8x256xf32>
    %198 = tpu.matmul %197, %10, %cst_62 {dimension_numbers = #tpu.dot_dimension_numbers<[1], [0], [0], [1], [0, 0, 1, 1], [], []>} : vector<8x32xbf16>, vector<32x256xbf16>, vector<8x256xf32> -> vector<8x256xf32>
    %199 = arith.truncf %171 : vector<8x32xf32> to vector<8x32xbf16>
    %cst_63 = arith.constant dense<0.000000e+00> : vector<8x128xf32>
    %200 = tpu.matmul %199, %11, %cst_63 {dimension_numbers = #tpu.dot_dimension_numbers<[1], [0], [0], [1], [0, 0, 1, 1], [], []>} : vector<8x32xbf16>, vector<32x128xbf16>, vector<8x128xf32> -> vector<8x128xf32>
    %201 = vector.extract_strided_slice %198 {offsets = [0, 0], sizes = [8, 128], strides = [1, 1]} : vector<8x256xf32> to vector<8x128xf32>
    %202 = vector.extract_strided_slice %198 {offsets = [0, 128], sizes = [8, 128], strides = [1, 1]} : vector<8x256xf32> to vector<8x128xf32>
    %203 = arith.addf %202, %200 : vector<8x128xf32>
    %204 = vector.broadcast %12 : vector<1x128xf32> to vector<8x128xf32>
    %205 = arith.addf %203, %204 : vector<8x128xf32>
    %206 = arith.negf %205 : vector<8x128xf32>
    %207 = math.exp %206 : vector<8x128xf32>
    %cst_64 = arith.constant 1.000000e+00 : f32
    %208 = vector.broadcast %cst_64 : f32 to vector<8x128xf32>
    %209 = arith.addf %208, %207 : vector<8x128xf32>
    %210 = arith.divf %208, %209 : vector<8x128xf32>
    %211 = vector.extract_strided_slice %210 {offsets = [0, 0], sizes = [8, 32], strides = [1, 1]} : vector<8x128xf32> to vector<8x32xf32>
    %212 = vector.extract_strided_slice %210 {offsets = [0, 32], sizes = [8, 32], strides = [1, 1]} : vector<8x128xf32> to vector<8x32xf32>
    %213 = vector.extract_strided_slice %210 {offsets = [0, 64], sizes = [8, 32], strides = [1, 1]} : vector<8x128xf32> to vector<8x32xf32>
    %cst_65 = arith.constant 2.000000e+00 : f32
    %214 = vector.broadcast %cst_65 : f32 to vector<8x32xf32>
    %215 = arith.mulf %214, %213 : vector<8x32xf32>
    %cst_66 = arith.constant 1.000000e+00 : f32
    %216 = vector.broadcast %cst_66 : f32 to vector<8x32xf32>
    %217 = arith.subf %215, %216 : vector<8x32xf32>
    %218 = vector.extract_strided_slice %210 {offsets = [0, 96], sizes = [8, 32], strides = [1, 1]} : vector<8x128xf32> to vector<8x32xf32>
    %219 = arith.mulf %212, %169 : vector<8x32xf32>
    %220 = arith.mulf %211, %217 : vector<8x32xf32>
    %221 = arith.addf %219, %220 : vector<8x32xf32>
    %222 = math.tanh %221 : vector<8x32xf32>
    %223 = arith.mulf %218, %222 : vector<8x32xf32>
    %224 = arith.index_cast %175 : i32 to index
    %c0_67 = arith.constant 0 : index
    %225 = vector.load %arg7[%224, %c0_67] : memref<64x32xf32, #tpu.memory_space<vmem>>, vector<8x32xf32>
    tpu.vector_store %arg7[%224, %c0_67], %223 {strides = array<i32>} : memref<64x32xf32, #tpu.memory_space<vmem>>, vector<8x32xf32>,
    %c4_i32 = arith.constant 4 : i32
    %c8_i32_68 = arith.constant 8 : i32
    %226 = arith.muli %c4_i32, %c8_i32_68 : i32
    %227 = tpu.assume_multiple %226, 8 : i32
    %228 = arith.index_cast %227 : i32 to index
    %c0_69 = arith.constant 0 : index
    %229 = vector.load %arg8[%228, %c0_69] : memref<64x128xf32, #tpu.memory_space<vmem>>, vector<8x128xf32>
    %230 = arith.addf %229, %201 : vector<8x128xf32>
    %231 = arith.negf %230 : vector<8x128xf32>
    %232 = math.exp %231 : vector<8x128xf32>
    %cst_70 = arith.constant 1.000000e+00 : f32
    %233 = vector.broadcast %cst_70 : f32 to vector<8x128xf32>
    %234 = arith.addf %233, %232 : vector<8x128xf32>
    %235 = arith.divf %233, %234 : vector<8x128xf32>
    %236 = vector.extract_strided_slice %235 {offsets = [0, 0], sizes = [8, 32], strides = [1, 1]} : vector<8x128xf32> to vector<8x32xf32>
    %237 = vector.extract_strided_slice %235 {offsets = [0, 32], sizes = [8, 32], strides = [1, 1]} : vector<8x128xf32> to vector<8x32xf32>
    %238 = vector.extract_strided_slice %235 {offsets = [0, 64], sizes = [8, 32], strides = [1, 1]} : vector<8x128xf32> to vector<8x32xf32>
    %cst_71 = arith.constant 2.000000e+00 : f32
    %239 = vector.broadcast %cst_71 : f32 to vector<8x32xf32>
    %240 = arith.mulf %239, %238 : vector<8x32xf32>
    %cst_72 = arith.constant 1.000000e+00 : f32
    %241 = vector.broadcast %cst_72 : f32 to vector<8x32xf32>
    %242 = arith.subf %240, %241 : vector<8x32xf32>
    %243 = vector.extract_strided_slice %235 {offsets = [0, 96], sizes = [8, 32], strides = [1, 1]} : vector<8x128xf32> to vector<8x32xf32>
    %244 = arith.mulf %237, %194 : vector<8x32xf32>
    %245 = arith.mulf %236, %242 : vector<8x32xf32>
    %246 = arith.addf %244, %245 : vector<8x32xf32>
    %247 = math.tanh %246 : vector<8x32xf32>
    %248 = arith.mulf %243, %247 : vector<8x32xf32>
    %249 = arith.truncf %248 : vector<8x32xf32> to vector<8x32xbf16>
    %cst_73 = arith.constant dense<0.000000e+00> : vector<8x256xf32>
    %250 = tpu.matmul %249, %10, %cst_73 {dimension_numbers = #tpu.dot_dimension_numbers<[1], [0], [0], [1], [0, 0, 1, 1], [], []>} : vector<8x32xbf16>, vector<32x256xbf16>, vector<8x256xf32> -> vector<8x256xf32>
    %251 = arith.truncf %223 : vector<8x32xf32> to vector<8x32xbf16>
    %cst_74 = arith.constant dense<0.000000e+00> : vector<8x128xf32>
    %252 = tpu.matmul %251, %11, %cst_74 {dimension_numbers = #tpu.dot_dimension_numbers<[1], [0], [0], [1], [0, 0, 1, 1], [], []>} : vector<8x32xbf16>, vector<32x128xbf16>, vector<8x128xf32> -> vector<8x128xf32>
    %253 = vector.extract_strided_slice %250 {offsets = [0, 0], sizes = [8, 128], strides = [1, 1]} : vector<8x256xf32> to vector<8x128xf32>
    %254 = vector.extract_strided_slice %250 {offsets = [0, 128], sizes = [8, 128], strides = [1, 1]} : vector<8x256xf32> to vector<8x128xf32>
    %255 = arith.addf %254, %252 : vector<8x128xf32>
    %256 = vector.broadcast %12 : vector<1x128xf32> to vector<8x128xf32>
    %257 = arith.addf %255, %256 : vector<8x128xf32>
    %258 = arith.negf %257 : vector<8x128xf32>
    %259 = math.exp %258 : vector<8x128xf32>
    %cst_75 = arith.constant 1.000000e+00 : f32
    %260 = vector.broadcast %cst_75 : f32 to vector<8x128xf32>
    %261 = arith.addf %260, %259 : vector<8x128xf32>
    %262 = arith.divf %260, %261 : vector<8x128xf32>
    %263 = vector.extract_strided_slice %262 {offsets = [0, 0], sizes = [8, 32], strides = [1, 1]} : vector<8x128xf32> to vector<8x32xf32>
    %264 = vector.extract_strided_slice %262 {offsets = [0, 32], sizes = [8, 32], strides = [1, 1]} : vector<8x128xf32> to vector<8x32xf32>
    %265 = vector.extract_strided_slice %262 {offsets = [0, 64], sizes = [8, 32], strides = [1, 1]} : vector<8x128xf32> to vector<8x32xf32>
    %cst_76 = arith.constant 2.000000e+00 : f32
    %266 = vector.broadcast %cst_76 : f32 to vector<8x32xf32>
    %267 = arith.mulf %266, %265 : vector<8x32xf32>
    %cst_77 = arith.constant 1.000000e+00 : f32
    %268 = vector.broadcast %cst_77 : f32 to vector<8x32xf32>
    %269 = arith.subf %267, %268 : vector<8x32xf32>
    %270 = vector.extract_strided_slice %262 {offsets = [0, 96], sizes = [8, 32], strides = [1, 1]} : vector<8x128xf32> to vector<8x32xf32>
    %271 = arith.mulf %264, %221 : vector<8x32xf32>
    %272 = arith.mulf %263, %269 : vector<8x32xf32>
    %273 = arith.addf %271, %272 : vector<8x32xf32>
    %274 = math.tanh %273 : vector<8x32xf32>
    %275 = arith.mulf %270, %274 : vector<8x32xf32>
    %276 = arith.index_cast %227 : i32 to index
    %c0_78 = arith.constant 0 : index
    %277 = vector.load %arg7[%276, %c0_78] : memref<64x32xf32, #tpu.memory_space<vmem>>, vector<8x32xf32>
    tpu.vector_store %arg7[%276, %c0_78], %275 {strides = array<i32>} : memref<64x32xf32, #tpu.memory_space<vmem>>, vector<8x32xf32>,
    %c5_i32 = arith.constant 5 : i32
    %c8_i32_79 = arith.constant 8 : i32
    %278 = arith.muli %c5_i32, %c8_i32_79 : i32
    %279 = tpu.assume_multiple %278, 8 : i32
    %280 = arith.index_cast %279 : i32 to index
    %c0_80 = arith.constant 0 : index
    %281 = vector.load %arg8[%280, %c0_80] : memref<64x128xf32, #tpu.memory_space<vmem>>, vector<8x128xf32>
    %282 = arith.addf %281, %253 : vector<8x128xf32>
    %283 = arith.negf %282 : vector<8x128xf32>
    %284 = math.exp %283 : vector<8x128xf32>
    %cst_81 = arith.constant 1.000000e+00 : f32
    %285 = vector.broadcast %cst_81 : f32 to vector<8x128xf32>
    %286 = arith.addf %285, %284 : vector<8x128xf32>
    %287 = arith.divf %285, %286 : vector<8x128xf32>
    %288 = vector.extract_strided_slice %287 {offsets = [0, 0], sizes = [8, 32], strides = [1, 1]} : vector<8x128xf32> to vector<8x32xf32>
    %289 = vector.extract_strided_slice %287 {offsets = [0, 32], sizes = [8, 32], strides = [1, 1]} : vector<8x128xf32> to vector<8x32xf32>
    %290 = vector.extract_strided_slice %287 {offsets = [0, 64], sizes = [8, 32], strides = [1, 1]} : vector<8x128xf32> to vector<8x32xf32>
    %cst_82 = arith.constant 2.000000e+00 : f32
    %291 = vector.broadcast %cst_82 : f32 to vector<8x32xf32>
    %292 = arith.mulf %291, %290 : vector<8x32xf32>
    %cst_83 = arith.constant 1.000000e+00 : f32
    %293 = vector.broadcast %cst_83 : f32 to vector<8x32xf32>
    %294 = arith.subf %292, %293 : vector<8x32xf32>
    %295 = vector.extract_strided_slice %287 {offsets = [0, 96], sizes = [8, 32], strides = [1, 1]} : vector<8x128xf32> to vector<8x32xf32>
    %296 = arith.mulf %289, %246 : vector<8x32xf32>
    %297 = arith.mulf %288, %294 : vector<8x32xf32>
    %298 = arith.addf %296, %297 : vector<8x32xf32>
    %299 = math.tanh %298 : vector<8x32xf32>
    %300 = arith.mulf %295, %299 : vector<8x32xf32>
    %301 = arith.truncf %300 : vector<8x32xf32> to vector<8x32xbf16>
    %cst_84 = arith.constant dense<0.000000e+00> : vector<8x256xf32>
    %302 = tpu.matmul %301, %10, %cst_84 {dimension_numbers = #tpu.dot_dimension_numbers<[1], [0], [0], [1], [0, 0, 1, 1], [], []>} : vector<8x32xbf16>, vector<32x256xbf16>, vector<8x256xf32> -> vector<8x256xf32>
    %303 = arith.truncf %275 : vector<8x32xf32> to vector<8x32xbf16>
    %cst_85 = arith.constant dense<0.000000e+00> : vector<8x128xf32>
    %304 = tpu.matmul %303, %11, %cst_85 {dimension_numbers = #tpu.dot_dimension_numbers<[1], [0], [0], [1], [0, 0, 1, 1], [], []>} : vector<8x32xbf16>, vector<32x128xbf16>, vector<8x128xf32> -> vector<8x128xf32>
    %305 = vector.extract_strided_slice %302 {offsets = [0, 0], sizes = [8, 128], strides = [1, 1]} : vector<8x256xf32> to vector<8x128xf32>
    %306 = vector.extract_strided_slice %302 {offsets = [0, 128], sizes = [8, 128], strides = [1, 1]} : vector<8x256xf32> to vector<8x128xf32>
    %307 = arith.addf %306, %304 : vector<8x128xf32>
    %308 = vector.broadcast %12 : vector<1x128xf32> to vector<8x128xf32>
    %309 = arith.addf %307, %308 : vector<8x128xf32>
    %310 = arith.negf %309 : vector<8x128xf32>
    %311 = math.exp %310 : vector<8x128xf32>
    %cst_86 = arith.constant 1.000000e+00 : f32
    %312 = vector.broadcast %cst_86 : f32 to vector<8x128xf32>
    %313 = arith.addf %312, %311 : vector<8x128xf32>
    %314 = arith.divf %312, %313 : vector<8x128xf32>
    %315 = vector.extract_strided_slice %314 {offsets = [0, 0], sizes = [8, 32], strides = [1, 1]} : vector<8x128xf32> to vector<8x32xf32>
    %316 = vector.extract_strided_slice %314 {offsets = [0, 32], sizes = [8, 32], strides = [1, 1]} : vector<8x128xf32> to vector<8x32xf32>
    %317 = vector.extract_strided_slice %314 {offsets = [0, 64], sizes = [8, 32], strides = [1, 1]} : vector<8x128xf32> to vector<8x32xf32>
    %cst_87 = arith.constant 2.000000e+00 : f32
    %318 = vector.broadcast %cst_87 : f32 to vector<8x32xf32>
    %319 = arith.mulf %318, %317 : vector<8x32xf32>
    %cst_88 = arith.constant 1.000000e+00 : f32
    %320 = vector.broadcast %cst_88 : f32 to vector<8x32xf32>
    %321 = arith.subf %319, %320 : vector<8x32xf32>
    %322 = vector.extract_strided_slice %314 {offsets = [0, 96], sizes = [8, 32], strides = [1, 1]} : vector<8x128xf32> to vector<8x32xf32>
    %323 = arith.mulf %316, %273 : vector<8x32xf32>
    %324 = arith.mulf %315, %321 : vector<8x32xf32>
    %325 = arith.addf %323, %324 : vector<8x32xf32>
    %326 = math.tanh %325 : vector<8x32xf32>
    %327 = arith.mulf %322, %326 : vector<8x32xf32>
    %328 = arith.index_cast %279 : i32 to index
    %c0_89 = arith.constant 0 : index
    %329 = vector.load %arg7[%328, %c0_89] : memref<64x32xf32, #tpu.memory_space<vmem>>, vector<8x32xf32>
    tpu.vector_store %arg7[%328, %c0_89], %327 {strides = array<i32>} : memref<64x32xf32, #tpu.memory_space<vmem>>, vector<8x32xf32>,
    %c6_i32 = arith.constant 6 : i32
    %c8_i32_90 = arith.constant 8 : i32
    %330 = arith.muli %c6_i32, %c8_i32_90 : i32
    %331 = tpu.assume_multiple %330, 8 : i32
    %332 = arith.index_cast %331 : i32 to index
    %c0_91 = arith.constant 0 : index
    %333 = vector.load %arg8[%332, %c0_91] : memref<64x128xf32, #tpu.memory_space<vmem>>, vector<8x128xf32>
    %334 = arith.addf %333, %305 : vector<8x128xf32>
    %335 = arith.negf %334 : vector<8x128xf32>
    %336 = math.exp %335 : vector<8x128xf32>
    %cst_92 = arith.constant 1.000000e+00 : f32
    %337 = vector.broadcast %cst_92 : f32 to vector<8x128xf32>
    %338 = arith.addf %337, %336 : vector<8x128xf32>
    %339 = arith.divf %337, %338 : vector<8x128xf32>
    %340 = vector.extract_strided_slice %339 {offsets = [0, 0], sizes = [8, 32], strides = [1, 1]} : vector<8x128xf32> to vector<8x32xf32>
    %341 = vector.extract_strided_slice %339 {offsets = [0, 32], sizes = [8, 32], strides = [1, 1]} : vector<8x128xf32> to vector<8x32xf32>
    %342 = vector.extract_strided_slice %339 {offsets = [0, 64], sizes = [8, 32], strides = [1, 1]} : vector<8x128xf32> to vector<8x32xf32>
    %cst_93 = arith.constant 2.000000e+00 : f32
    %343 = vector.broadcast %cst_93 : f32 to vector<8x32xf32>
    %344 = arith.mulf %343, %342 : vector<8x32xf32>
    %cst_94 = arith.constant 1.000000e+00 : f32
    %345 = vector.broadcast %cst_94 : f32 to vector<8x32xf32>
    %346 = arith.subf %344, %345 : vector<8x32xf32>
    %347 = vector.extract_strided_slice %339 {offsets = [0, 96], sizes = [8, 32], strides = [1, 1]} : vector<8x128xf32> to vector<8x32xf32>
    %348 = arith.mulf %341, %298 : vector<8x32xf32>
    %349 = arith.mulf %340, %346 : vector<8x32xf32>
    %350 = arith.addf %348, %349 : vector<8x32xf32>
    %351 = math.tanh %350 : vector<8x32xf32>
    %352 = arith.mulf %347, %351 : vector<8x32xf32>
    %353 = arith.truncf %352 : vector<8x32xf32> to vector<8x32xbf16>
    %cst_95 = arith.constant dense<0.000000e+00> : vector<8x256xf32>
    %354 = tpu.matmul %353, %10, %cst_95 {dimension_numbers = #tpu.dot_dimension_numbers<[1], [0], [0], [1], [0, 0, 1, 1], [], []>} : vector<8x32xbf16>, vector<32x256xbf16>, vector<8x256xf32> -> vector<8x256xf32>
    %355 = arith.truncf %327 : vector<8x32xf32> to vector<8x32xbf16>
    %cst_96 = arith.constant dense<0.000000e+00> : vector<8x128xf32>
    %356 = tpu.matmul %355, %11, %cst_96 {dimension_numbers = #tpu.dot_dimension_numbers<[1], [0], [0], [1], [0, 0, 1, 1], [], []>} : vector<8x32xbf16>, vector<32x128xbf16>, vector<8x128xf32> -> vector<8x128xf32>
    %357 = vector.extract_strided_slice %354 {offsets = [0, 0], sizes = [8, 128], strides = [1, 1]} : vector<8x256xf32> to vector<8x128xf32>
    %358 = vector.extract_strided_slice %354 {offsets = [0, 128], sizes = [8, 128], strides = [1, 1]} : vector<8x256xf32> to vector<8x128xf32>
    %359 = arith.addf %358, %356 : vector<8x128xf32>
    %360 = vector.broadcast %12 : vector<1x128xf32> to vector<8x128xf32>
    %361 = arith.addf %359, %360 : vector<8x128xf32>
    %362 = arith.negf %361 : vector<8x128xf32>
    %363 = math.exp %362 : vector<8x128xf32>
    %cst_97 = arith.constant 1.000000e+00 : f32
    %364 = vector.broadcast %cst_97 : f32 to vector<8x128xf32>
    %365 = arith.addf %364, %363 : vector<8x128xf32>
    %366 = arith.divf %364, %365 : vector<8x128xf32>
    %367 = vector.extract_strided_slice %366 {offsets = [0, 0], sizes = [8, 32], strides = [1, 1]} : vector<8x128xf32> to vector<8x32xf32>
    %368 = vector.extract_strided_slice %366 {offsets = [0, 32], sizes = [8, 32], strides = [1, 1]} : vector<8x128xf32> to vector<8x32xf32>
    %369 = vector.extract_strided_slice %366 {offsets = [0, 64], sizes = [8, 32], strides = [1, 1]} : vector<8x128xf32> to vector<8x32xf32>
    %cst_98 = arith.constant 2.000000e+00 : f32
    %370 = vector.broadcast %cst_98 : f32 to vector<8x32xf32>
    %371 = arith.mulf %370, %369 : vector<8x32xf32>
    %cst_99 = arith.constant 1.000000e+00 : f32
    %372 = vector.broadcast %cst_99 : f32 to vector<8x32xf32>
    %373 = arith.subf %371, %372 : vector<8x32xf32>
    %374 = vector.extract_strided_slice %366 {offsets = [0, 96], sizes = [8, 32], strides = [1, 1]} : vector<8x128xf32> to vector<8x32xf32>
    %375 = arith.mulf %368, %325 : vector<8x32xf32>
    %376 = arith.mulf %367, %373 : vector<8x32xf32>
    %377 = arith.addf %375, %376 : vector<8x32xf32>
    %378 = math.tanh %377 : vector<8x32xf32>
    %379 = arith.mulf %374, %378 : vector<8x32xf32>
    %380 = arith.index_cast %331 : i32 to index
    %c0_100 = arith.constant 0 : index
    %381 = vector.load %arg7[%380, %c0_100] : memref<64x32xf32, #tpu.memory_space<vmem>>, vector<8x32xf32>
    tpu.vector_store %arg7[%380, %c0_100], %379 {strides = array<i32>} : memref<64x32xf32, #tpu.memory_space<vmem>>, vector<8x32xf32>,
    %c7_i32 = arith.constant 7 : i32
    %c8_i32_101 = arith.constant 8 : i32
    %382 = arith.muli %c7_i32, %c8_i32_101 : i32
    %383 = tpu.assume_multiple %382, 8 : i32
    %384 = arith.index_cast %383 : i32 to index
    %c0_102 = arith.constant 0 : index
    %385 = vector.load %arg8[%384, %c0_102] : memref<64x128xf32, #tpu.memory_space<vmem>>, vector<8x128xf32>
    %386 = arith.addf %385, %357 : vector<8x128xf32>
    %387 = arith.negf %386 : vector<8x128xf32>
    %388 = math.exp %387 : vector<8x128xf32>
    %cst_103 = arith.constant 1.000000e+00 : f32
    %389 = vector.broadcast %cst_103 : f32 to vector<8x128xf32>
    %390 = arith.addf %389, %388 : vector<8x128xf32>
    %391 = arith.divf %389, %390 : vector<8x128xf32>
    %392 = vector.extract_strided_slice %391 {offsets = [0, 0], sizes = [8, 32], strides = [1, 1]} : vector<8x128xf32> to vector<8x32xf32>
    %393 = vector.extract_strided_slice %391 {offsets = [0, 32], sizes = [8, 32], strides = [1, 1]} : vector<8x128xf32> to vector<8x32xf32>
    %394 = vector.extract_strided_slice %391 {offsets = [0, 64], sizes = [8, 32], strides = [1, 1]} : vector<8x128xf32> to vector<8x32xf32>
    %cst_104 = arith.constant 2.000000e+00 : f32
    %395 = vector.broadcast %cst_104 : f32 to vector<8x32xf32>
    %396 = arith.mulf %395, %394 : vector<8x32xf32>
    %cst_105 = arith.constant 1.000000e+00 : f32
    %397 = vector.broadcast %cst_105 : f32 to vector<8x32xf32>
    %398 = arith.subf %396, %397 : vector<8x32xf32>
    %399 = vector.extract_strided_slice %391 {offsets = [0, 96], sizes = [8, 32], strides = [1, 1]} : vector<8x128xf32> to vector<8x32xf32>
    %400 = arith.mulf %393, %350 : vector<8x32xf32>
    %401 = arith.mulf %392, %398 : vector<8x32xf32>
    %402 = arith.addf %400, %401 : vector<8x32xf32>
    %403 = math.tanh %402 : vector<8x32xf32>
    %404 = arith.mulf %399, %403 : vector<8x32xf32>
    %405 = arith.truncf %404 : vector<8x32xf32> to vector<8x32xbf16>
    %cst_106 = arith.constant dense<0.000000e+00> : vector<8x256xf32>
    %406 = tpu.matmul %405, %10, %cst_106 {dimension_numbers = #tpu.dot_dimension_numbers<[1], [0], [0], [1], [0, 0, 1, 1], [], []>} : vector<8x32xbf16>, vector<32x256xbf16>, vector<8x256xf32> -> vector<8x256xf32>
    %407 = arith.truncf %379 : vector<8x32xf32> to vector<8x32xbf16>
    %cst_107 = arith.constant dense<0.000000e+00> : vector<8x128xf32>
    %408 = tpu.matmul %407, %11, %cst_107 {dimension_numbers = #tpu.dot_dimension_numbers<[1], [0], [0], [1], [0, 0, 1, 1], [], []>} : vector<8x32xbf16>, vector<32x128xbf16>, vector<8x128xf32> -> vector<8x128xf32>
    %409 = vector.extract_strided_slice %406 {offsets = [0, 0], sizes = [8, 128], strides = [1, 1]} : vector<8x256xf32> to vector<8x128xf32>
    %410 = vector.extract_strided_slice %406 {offsets = [0, 128], sizes = [8, 128], strides = [1, 1]} : vector<8x256xf32> to vector<8x128xf32>
    %411 = arith.addf %410, %408 : vector<8x128xf32>
    %412 = vector.broadcast %12 : vector<1x128xf32> to vector<8x128xf32>
    %413 = arith.addf %411, %412 : vector<8x128xf32>
    %414 = arith.negf %413 : vector<8x128xf32>
    %415 = math.exp %414 : vector<8x128xf32>
    %cst_108 = arith.constant 1.000000e+00 : f32
    %416 = vector.broadcast %cst_108 : f32 to vector<8x128xf32>
    %417 = arith.addf %416, %415 : vector<8x128xf32>
    %418 = arith.divf %416, %417 : vector<8x128xf32>
    %419 = vector.extract_strided_slice %418 {offsets = [0, 0], sizes = [8, 32], strides = [1, 1]} : vector<8x128xf32> to vector<8x32xf32>
    %420 = vector.extract_strided_slice %418 {offsets = [0, 32], sizes = [8, 32], strides = [1, 1]} : vector<8x128xf32> to vector<8x32xf32>
    %421 = vector.extract_strided_slice %418 {offsets = [0, 64], sizes = [8, 32], strides = [1, 1]} : vector<8x128xf32> to vector<8x32xf32>
    %cst_109 = arith.constant 2.000000e+00 : f32
    %422 = vector.broadcast %cst_109 : f32 to vector<8x32xf32>
    %423 = arith.mulf %422, %421 : vector<8x32xf32>
    %cst_110 = arith.constant 1.000000e+00 : f32
    %424 = vector.broadcast %cst_110 : f32 to vector<8x32xf32>
    %425 = arith.subf %423, %424 : vector<8x32xf32>
    %426 = vector.extract_strided_slice %418 {offsets = [0, 96], sizes = [8, 32], strides = [1, 1]} : vector<8x128xf32> to vector<8x32xf32>
    %427 = arith.mulf %420, %377 : vector<8x32xf32>
    %428 = arith.mulf %419, %425 : vector<8x32xf32>
    %429 = arith.addf %427, %428 : vector<8x32xf32>
    %430 = math.tanh %429 : vector<8x32xf32>
    %431 = arith.mulf %426, %430 : vector<8x32xf32>
    %432 = arith.index_cast %383 : i32 to index
    %c0_111 = arith.constant 0 : index
    %433 = vector.load %arg7[%432, %c0_111] : memref<64x32xf32, #tpu.memory_space<vmem>>, vector<8x32xf32>
    tpu.vector_store %arg7[%432, %c0_111], %431 {strides = array<i32>} : memref<64x32xf32, #tpu.memory_space<vmem>>, vector<8x32xf32>,
    %c8_i32_112 = arith.constant 8 : i32
    %c0_113 = arith.constant 0 : index
    %c0_114 = arith.constant 0 : index
    %434 = vector.load %arg10[%c0_113, %c0_114] : memref<8x32xf32, #tpu.memory_space<vmem>>, vector<8x32xf32>
    tpu.vector_store %arg10[%c0_113, %c0_114], %404 {strides = array<i32>} : memref<8x32xf32, #tpu.memory_space<vmem>>, vector<8x32xf32>,
    %c0_115 = arith.constant 0 : index
    %c0_116 = arith.constant 0 : index
    %435 = vector.load %arg11[%c0_115, %c0_116] : memref<8x32xf32, #tpu.memory_space<vmem>>, vector<8x32xf32>
    tpu.vector_store %arg11[%c0_115, %c0_116], %402 {strides = array<i32>} : memref<8x32xf32, #tpu.memory_space<vmem>>, vector<8x32xf32>,
    %c0_117 = arith.constant 0 : index
    %c0_118 = arith.constant 0 : index
    %436 = vector.load %arg12[%c0_117, %c0_118] : memref<8x32xf32, #tpu.memory_space<vmem>>, vector<8x32xf32>
    tpu.vector_store %arg12[%c0_117, %c0_118], %431 {strides = array<i32>} : memref<8x32xf32, #tpu.memory_space<vmem>>, vector<8x32xf32>,
    %c0_119 = arith.constant 0 : index
    %c0_120 = arith.constant 0 : index
    %437 = vector.load %arg13[%c0_119, %c0_120] : memref<8x32xf32, #tpu.memory_space<vmem>>, vector<8x32xf32>
    tpu.vector_store %arg13[%c0_119, %c0_120], %429 {strides = array<i32>} : memref<8x32xf32, #tpu.memory_space<vmem>>, vector<8x32xf32>,
    %c0_121 = arith.constant 0 : index
    %c0_122 = arith.constant 0 : index
    %438 = vector.load %arg9[%c0_121, %c0_122] : memref<8x128xf32, #tpu.memory_space<vmem>>, vector<8x128xf32>
    tpu.vector_store %arg9[%c0_121, %c0_122], %409 {strides = array<i32>} : memref<8x128xf32, #tpu.memory_space<vmem>>, vector<8x128xf32>,
    return
  }
  func.func @transform_0(%arg0: i32) -> (i32, i32) {
    %c0_i32 = arith.constant 0 : i32
    %c0_i32_0 = arith.constant 0 : i32
    return %arg0, %c0_i32 : i32, i32
  }
  func.func @transform_1(%arg0: i32) -> (i32, i32) {
    %c0_i32 = arith.constant 0 : i32
    %c0_i32_0 = arith.constant 0 : i32
    %c0_i32_1 = arith.constant 0 : i32
    return %c0_i32, %c0_i32_0 : i32, i32
  }
  func.func @transform_2(%arg0: i32) -> (i32, i32) {
    %c0_i32 = arith.constant 0 : i32
    %c0_i32_0 = arith.constant 0 : i32
    %c0_i32_1 = arith.constant 0 : i32
    return %c0_i32, %c0_i32_0 : i32, i32
  }
  func.func @transform_3(%arg0: i32) -> (i32, i32) {
    %c0_i32 = arith.constant 0 : i32
    %c0_i32_0 = arith.constant 0 : i32
    %c0_i32_1 = arith.constant 0 : i32
    return %c0_i32, %c0_i32_0 : i32, i32
  }
  func.func @transform_4(%arg0: i32) -> (i32, i32) {
    %c0_i32 = arith.constant 0 : i32
    %c0_i32_0 = arith.constant 0 : i32
    %c0_i32_1 = arith.constant 0 : i32
    return %c0_i32, %c0_i32_0 : i32, i32
  }
  func.func @transform_5(%arg0: i32) -> (i32, i32) {
    %c0_i32 = arith.constant 0 : i32
    %c0_i32_0 = arith.constant 0 : i32
    %c0_i32_1 = arith.constant 0 : i32
    return %c0_i32, %c0_i32_0 : i32, i32
  }
  func.func @transform_6(%arg0: i32) -> (i32, i32) {
    %c0_i32 = arith.constant 0 : i32
    %c0_i32_0 = arith.constant 0 : i32
    return %arg0, %c0_i32 : i32, i32
  }
}

</mosaic_0001>

<llo_original>
// kernel: lstm_layer_forward.1
$region0: #{lstm_layer_forward.1}
  #allocation0 [shape = 'u32[]', space=smem, size = 0x4, offset = 0x4, fixed_abs, tag = 'smem constant byte address 0x4 - core index']
  #allocation1 [shape = 'u32[72,128]{1,0:T(1,128)}', space=vmem, size = 0x9000, scoped, tag = 'internal scratch']
  #allocation2 [shape = 'f32[64,128]{1,0:T(8,128)}', space=vmem, size = 0x8000, scoped, tag = 'scratch operand']
  #allocation3 [shape = 'f32[8,128]{1,0:T(8,128)}', space=vmem, size = 0x1000, scoped, tag = 'scratch operand']
  #allocation4 [shape = 'f32[8,32]{1,0:T(8,128)}', space=vmem, size = 0x1000, scoped, tag = 'scratch operand']
  #allocation5 [shape = 'f32[8,32]{1,0:T(8,128)}', space=vmem, size = 0x1000, scoped, tag = 'scratch operand']
  #allocation6 [shape = 'f32[8,32]{1,0:T(8,128)}', space=vmem, size = 0x1000, scoped, tag = 'scratch operand']
  #allocation7 [shape = 'f32[8,32]{1,0:T(8,128)}', space=vmem, size = 0x1000, scoped, tag = 'scratch operand']
  %s0 = inlined_call_operand.vmem [shape: bf16[64,32], index: 0, kind: input, shape index: {}]
  %s1 = inlined_call_operand.vmem [shape: bf16[32,128], index: 1, kind: input, shape index: {}]
  %s2 = inlined_call_operand.vmem [shape: f32[1,128], index: 2, kind: input, shape index: {}]
  %s3 = inlined_call_operand.vmem [shape: bf16[32,256], index: 3, kind: input, shape index: {}]
  %s4 = inlined_call_operand.vmem [shape: bf16[32,128], index: 4, kind: input, shape index: {}]
  %s5 = inlined_call_operand.vmem [shape: f32[1,128], index: 5, kind: input, shape index: {}]
  %s6 = inlined_call_operand.vmem [shape: f32[64,32], index: 6, kind: output, shape index: {}]
  %s7 = sld [smem:[#allocation0]]
  $region38: #{lstm_layer_forward.1} parent=0
    _
  %s9 = ssub.s32 1, %s7
  %s10 = scalar_select 0, %s9, %s7
  // Predicated region
  $region2: #{lstm_layer_forward.1} parent=0 // pred_check
    _
  $region3: #{lstm_layer_forward.1} parent=0 // pred_check_branch
    %12 = sbr.rel (0) target = $region5
  $region4: #{lstm_layer_forward.1} parent=0 // pred_region
    _
  $region5: #{lstm_layer_forward.1} parent=0 // pred_fallthru
    _
  // Predicated region
  $region6: #{lstm_layer_forward.1} parent=0 // pred_check
    _
  $region7: #{lstm_layer_forward.1} parent=0 // pred_check_branch
    %14 = sbr.rel (0) target = $region9
  $region8: #{lstm_layer_forward.1} parent=0 // pred_region
    _
  $region9: #{lstm_layer_forward.1} parent=0 // pred_fallthru
    _
  // Predicated region
  $region10: #{lstm_layer_forward.1} parent=0 // pred_check
    _
  $region11: #{lstm_layer_forward.1} parent=0 // pred_check_branch
    %16 = sbr.rel (0) target = $region13
  $region12: #{lstm_layer_forward.1} parent=0 // pred_region
    _
  $region13: #{lstm_layer_forward.1} parent=0 // pred_fallthru
    _
  // Predicated region
  $region14: #{lstm_layer_forward.1} parent=0 // pred_check
    _
  $region15: #{lstm_layer_forward.1} parent=0 // pred_check_branch
    %18 = sbr.rel (0) target = $region17
  $region16: #{lstm_layer_forward.1} parent=0 // pred_region
    _
  $region17: #{lstm_layer_forward.1} parent=0 // pred_fallthru
    _
  // Predicated region
  $region18: #{lstm_layer_forward.1} parent=0 // pred_check
    _
  $region19: #{lstm_layer_forward.1} parent=0 // pred_check_branch
    %20 = sbr.rel (0) target = $region21
  $region20: #{lstm_layer_forward.1} parent=0 // pred_region
    _
  $region21: #{lstm_layer_forward.1} parent=0 // pred_fallthru
    _
  // Predicated region
  $region22: #{lstm_layer_forward.1} parent=0 // pred_check
    _
  $region23: #{lstm_layer_forward.1} parent=0 // pred_check_branch
    %22 = sbr.rel (0) target = $region25
  $region24: #{lstm_layer_forward.1} parent=0 // pred_region
    _
  $region25: #{lstm_layer_forward.1} parent=0 // pred_fallthru
    _
  %p24 = scmp.eq.s32.totalorder 0, 0
  // Predicated region
  $region26: #{lstm_layer_forward.1} parent=0 // pred_check
    %p25 = pneg %p24
  $region27: #{lstm_layer_forward.1} parent=0 // pred_check_branch
    %27 = sbr.rel (%p25) target = $region29
  $region28: #{lstm_layer_forward.1} parent=0 // pred_region
    %28 = vst [vmem:[#allocation3] sm:$0xff] 0.0
    %vm29 = vcmask 261120
    %30 = vst.msk [vmem:[#allocation4] sm:$0xff] %vm29, 0.0
    %31 = vst.msk [vmem:[#allocation5] sm:$0xff] %vm29, 0.0
    %32 = vst.msk [vmem:[#allocation6] sm:$0xff] %vm29, 0.0
    %33 = vst.msk [vmem:[#allocation7] sm:$0xff] %vm29, 0.0
  $region29: #{lstm_layer_forward.1} parent=0 // pred_fallthru
    _
  %v34 = vld [vmem:[%s0] sm:$0xf]
  %v35 = vld [vmem:[%s0 + $0x4] sm:$0xf]
  %v36 = vld [vmem:[%s0 + $0x8] sm:$0xf]
  %v37 = vld [vmem:[%s0 + $0xc] sm:$0xf]
  %v38 = vld [vmem:[%s0 + $0x10] sm:$0xf]
  %v39 = vld [vmem:[%s0 + $0x14] sm:$0xf]
  %v40 = vld [vmem:[%s0 + $0x18] sm:$0xf]
  %v41 = vld [vmem:[%s0 + $0x1c] sm:$0xf]
  %v42 = vld [vmem:[%s1] sm:$0xf]
  %v43 = vld [vmem:[%s1 + $0x4] sm:$0xf]
  %v44 = vld [vmem:[%s1 + $0x8] sm:$0xf]
  %v45 = vld [vmem:[%s1 + $0xc] sm:$0xf]
  %v46 = vld [vmem:[%s2] sm:$0x1]
  %v48 = vperm.slane %v46, 0
  %v58 = vunpack.c.l.b16 %v34
  %v59 = vunpack.c.l.b16 %v35
  %v60 = vunpack.c.l.b16 %v36
  %v61 = vunpack.c.l.b16 %v37
  %v62 = vunpack.c.l.b16 %v38
  %v63 = vunpack.c.l.b16 %v39
  %v64 = vunpack.c.l.b16 %v40
  %v65 = vunpack.c.l.b16 %v41
  %v66 = vpack.c.b16 %v59, %v58
  %v67 = vpack.c.b16 %v61, %v60
  %v68 = vpack.c.b16 %v63, %v62
  %v69 = vpack.c.b16 %v65, %v64
  %v74 = vunpack.c.l.b16 %v42
  %v75 = vunpack.c.l.b16 %v43
  %v76 = vunpack.c.l.b16 %v44
  %v77 = vunpack.c.l.b16 %v45
  %v78 = vpack.c.b16 %v75, %v74
  %v79 = vpack.c.b16 %v77, %v76
  %vm82 = vcmask 261120
  %v84 = vsel %vm82, %v66, 0
  %v87 = vsel %vm82, %v67, 0
  %v90 = vsel %vm82, %v68, 0
  %v93 = vsel %vm82, %v69, 0
  %95 = vmatpush.bf16.msra.mxu0 0
  %96 = vmatpush.bf16.msra.mxu0 0
  %97 = vmatpush.bf16.msra.mxu0 0
  %98 = vmatpush.bf16.msra.mxu0 0
  %99 = vmatpush.bf16.msra.mxu0 0
  %100 = vmatpush.bf16.msra.mxu0 0
  %101 = vmatpush.bf16.msra.mxu0 %v79
  %102 = vmatpush.bf16.msra.mxu0 %v78
  %103 = vmatmul.bf16.gmra.mxu0 %v84
  %v104 = vpop.f32.mrf.mxu0
  %v105 = vadd.f32 %v48, %v104
  %v106 = vpop.f32.mrf.mxu0
  %v107 = vadd.f32 %v48, %v106
  %108 = vmatmul.bf16.gmra.mxu0 %v87
  %v109 = vpop.f32.mrf.mxu0
  %v110 = vadd.f32 %v48, %v109
  %v111 = vpop.f32.mrf.mxu0
  %v112 = vadd.f32 %v48, %v111
  %113 = vmatmul.bf16.gmra.mxu0 %v90
  %v114 = vpop.f32.mrf.mxu0
  %v115 = vadd.f32 %v48, %v114
  %v116 = vpop.f32.mrf.mxu0
  %v117 = vadd.f32 %v48, %v116
  %118 = vmatmul.bf16.gmra.mxu0 %v93
  %v119 = vpop.f32.mrf.mxu0
  %v120 = vadd.f32 %v48, %v119
  %v121 = vpop.f32.mrf.mxu0
  %v122 = vadd.f32 %v48, %v121
  %123 = vdwg.mxu0
  %124 = vst [vmem:[#allocation2] sm:$0xff] %v105
  %125 = vst [vmem:[#allocation2 + $0x8] sm:$0xff] %v107
  %126 = vst [vmem:[#allocation2 + $0x10] sm:$0xff] %v110
  %127 = vst [vmem:[#allocation2 + $0x18] sm:$0xff] %v112
  %128 = vst [vmem:[#allocation2 + $0x20] sm:$0xff] %v115
  %129 = vst [vmem:[#allocation2 + $0x28] sm:$0xff] %v117
  %130 = vst [vmem:[#allocation2 + $0x30] sm:$0xff] %v120
  %131 = vst [vmem:[#allocation2 + $0x38] sm:$0xff] %v122
  %v132 = vld [vmem:[%s3] sm:$0xff]
  %v133 = vld [vmem:[%s3 + $0x8] sm:$0xff]
  %v134 = vld [vmem:[%s3 + $0x10] sm:$0xff]
  %v135 = vld [vmem:[%s3 + $0x18] sm:$0xff]
  %v136 = vld [vmem:[%s4] sm:$0xf]
  %v137 = vld [vmem:[%s4 + $0x4] sm:$0xf]
  %v138 = vld [vmem:[%s4 + $0x8] sm:$0xf]
  %v139 = vld [vmem:[%s4 + $0xc] sm:$0xf]
  %v140 = vld [vmem:[%s5] sm:$0x1]
  %v141 = vld [vmem:[#allocation5] sm:$0xff]
  %v142 = vld [vmem:[#allocation6] sm:$0xff]
  %v143 = vld [vmem:[#allocation7] sm:$0xff]
  %v144 = vld [vmem:[#allocation3] sm:$0xff]
  %v145 = vld [vmem:[#allocation2] sm:$0xff]
  %v146 = vadd.f32 %v145, %v144
  %v147 = vxor.u32 %v146, 2147483648
  %v148 = vmul.f32 %v147, 1.442695
  %v149 = vpow.pop %v148
  %v150 = vadd.f32 %v149, 1.0
  %v151 = vrcp.pop %v150
  %v152 = vmul.f32 %v150, %v151
  %v153 = vsub.f32 1.0, %v152
  %v154 = vmul.f32 %v151, %v153
  %v155 = vadd.f32 %v151, %v154
  %vm156 = vweird.f32 %v150
  %vm157 = vweird.f32 %v151
  %vm158 = vmor %vm156, %vm157
  %v159 = vsel %vm158, %v151, %v155
  %v160 = vand.u32 2147483647, %v150
  %vm161 = vcmp.eq.f32.partialorder %v160, 8.507059e+37
  %v162 = vand.u32 %v150, 2147483648
  %v163 = vor.u32 1.1754944e-38, %v162
  %v164 = vsel %vm161, %v163, %v159
  %v165 = vmul.f32 1.0, %v164
  %v166 = vmul.f32 %v165, 2.0
  %v167 = vsub.f32 %v166, 1.0
  %169 = vrot.lane.b32.xlu0 %v141, 32
  %v170 = vpop.permute.xlu0 %169
  %v172 = vmul.f32 %v165, %v170
  %174 = vrot.lane.b32.xlu0 %v167, 64
  %v175 = vpop.permute.xlu0 %174
  %v177 = vmul.f32 %v165, %v175
  %179 = vrot.lane.b32.xlu0 %v177, 32
  %v180 = vpop.permute.xlu0 %179
  %v182 = vadd.f32 %v172, %v180
  %v183 = vtanh.pop %v182
  %185 = vrot.lane.b32.xlu0 %v183, 64
  %v186 = vpop.permute.xlu0 %185
  %v188 = vmul.f32 %v165, %v186
  %v189 = vpack.c.bf16 %v188, %v188
  %191 = vrot.lane.b32.xlu0 %v189, 32
  %v192 = vpop.permute.xlu0 %191
  %v197 = vunpack.c.l.b16 %v132
  %v198 = vunpack.c.h.b16 %v132
  %v199 = vunpack.c.l.b16 %v133
  %v200 = vunpack.c.h.b16 %v133
  %v201 = vunpack.c.l.b16 %v134
  %v202 = vunpack.c.h.b16 %v134
  %v203 = vunpack.c.l.b16 %v135
  %v204 = vunpack.c.h.b16 %v135
  %v205 = vpack.c.b16 %v199, %v197
  %v206 = vpack.c.b16 %v200, %v198
  %v207 = vpack.c.b16 %v203, %v201
  %v208 = vpack.c.b16 %v204, %v202
  %v214 = vsel %vm82, %v192, 0
  %216 = vmatpush.bf16.msra.mxu0 0
  %217 = vmatpush.bf16.msra.mxu0 0
  %218 = vmatpush.bf16.msra.mxu0 0
  %219 = vmatpush.bf16.msra.mxu0 0
  %220 = vmatpush.bf16.msra.mxu0 0
  %221 = vmatpush.bf16.msra.mxu0 0
  %222 = vmatpush.bf16.msra.mxu0 %v207
  %223 = vmatpush.bf16.msra.mxu0 %v205
  %224 = vmatmul.bf16.gmra.mxu0 %v214
  %v225 = vpop.f32.mrf.mxu0
  %v226 = vadd.f32 0.0, %v225
  %v227 = vpop.f32.mrf.mxu0
  %228 = vdwg.mxu0
  %229 = vmatpush.bf16.msra.mxu0 0
  %230 = vmatpush.bf16.msra.mxu0 0
  %231 = vmatpush.bf16.msra.mxu0 0
  %232 = vmatpush.bf16.msra.mxu0 0
  %233 = vmatpush.bf16.msra.mxu0 0
  %234 = vmatpush.bf16.msra.mxu0 0
  %235 = vmatpush.bf16.msra.mxu0 %v208
  %236 = vmatpush.bf16.msra.mxu0 %v206
  %237 = vmatmul.bf16.gmra.mxu0 %v214
  %v238 = vpop.f32.mrf.mxu0
  %v239 = vadd.f32 0.0, %v238
  %v240 = vpop.f32.mrf.mxu0
  %241 = vdwg.mxu0
  %v242 = vpack.c.bf16 %v142, %v142
  %v247 = vunpack.c.l.b16 %v136
  %v248 = vunpack.c.l.b16 %v137
  %v249 = vunpack.c.l.b16 %v138
  %v250 = vunpack.c.l.b16 %v139
  %v251 = vpack.c.b16 %v248, %v247
  %v252 = vpack.c.b16 %v250, %v249
  %v256 = vsel %vm82, %v242, 0
  %258 = vmatpush.bf16.msra.mxu0 0
  %259 = vmatpush.bf16.msra.mxu0 0
  %260 = vmatpush.bf16.msra.mxu0 0
  %261 = vmatpush.bf16.msra.mxu0 0
  %262 = vmatpush.bf16.msra.mxu0 0
  %263 = vmatpush.bf16.msra.mxu0 0
  %264 = vmatpush.bf16.msra.mxu0 %v252
  %265 = vmatpush.bf16.msra.mxu0 %v251
  %266 = vmatmul.bf16.gmra.mxu0 %v256
  %v267 = vpop.f32.mrf.mxu0
  %v268 = vadd.f32 0.0, %v267
  %v269 = vpop.f32.mrf.mxu0
  %270 = vdwg.mxu0
  %v271 = vadd.f32 %v239, %v268
  %v273 = vperm.slane %v140, 0
  %v275 = vadd.f32 %v271, %v273
  %v276 = vxor.u32 %v275, 2147483648
  %v277 = vmul.f32 %v276, 1.442695
  %v278 = vpow.pop %v277
  %v279 = vadd.f32 %v278, 1.0
  %v280 = vrcp.pop %v279
  %v281 = vmul.f32 %v279, %v280
  %v282 = vsub.f32 1.0, %v281
  %v283 = vmul.f32 %v280, %v282
  %v284 = vadd.f32 %v280, %v283
  %vm285 = vweird.f32 %v279
  %vm286 = vweird.f32 %v280
  %vm287 = vmor %vm285, %vm286
  %v288 = vsel %vm287, %v280, %v284
  %v289 = vand.u32 2147483647, %v279
  %vm290 = vcmp.eq.f32.partialorder %v289, 8.507059e+37
  %v291 = vand.u32 %v279, 2147483648
  %v292 = vor.u32 1.1754944e-38, %v291
  %v293 = vsel %vm290, %v292, %v288
  %v294 = vmul.f32 1.0, %v293
  %v295 = vmul.f32 %v294, 2.0
  %v296 = vsub.f32 %v295, 1.0
  %298 = vrot.lane.b32.xlu0 %v143, 32
  %v299 = vpop.permute.xlu0 %298
  %v301 = vmul.f32 %v294, %v299
  %303 = vrot.lane.b32.xlu0 %v296, 64
  %v304 = vpop.permute.xlu0 %303
  %v306 = vmul.f32 %v294, %v304
  %308 = vrot.lane.b32.xlu0 %v306, 32
  %v309 = vpop.permute.xlu0 %308
  %v311 = vadd.f32 %v301, %v309
  %v312 = vtanh.pop %v311
  %314 = vrot.lane.b32.xlu0 %v312, 64
  %v315 = vpop.permute.xlu0 %314
  %v317 = vmul.f32 %v294, %v315
  %319 = vrot.lane.b32.xlu0 %v317, 32
  %v320 = vpop.permute.xlu0 %319
  %322 = vst.msk [vmem:[%s6] sm:$0xff] %vm82, %v320
  %s323 = scalar_lea.vmem [#allocation2], 8
  %v324 = vld [vmem:[%s323] sm:$0xff]
  %v325 = vadd.f32 %v324, %v226
  %v326 = vxor.u32 %v325, 2147483648
  %v327 = vmul.f32 %v326, 1.442695
  %v328 = vpow.pop %v327
  %v329 = vadd.f32 %v328, 1.0
  %v330 = vrcp.pop %v329
  %v331 = vmul.f32 %v329, %v330
  %v332 = vsub.f32 1.0, %v331
  %v333 = vmul.f32 %v330, %v332
  %v334 = vadd.f32 %v330, %v333
  %vm335 = vweird.f32 %v329
  %vm336 = vweird.f32 %v330
  %vm337 = vmor %vm335, %vm336
  %v338 = vsel %vm337, %v330, %v334
  %v339 = vand.u32 2147483647, %v329
  %vm340 = vcmp.eq.f32.partialorder %v339, 8.507059e+37
  %v341 = vand.u32 %v329, 2147483648
  %v342 = vor.u32 1.1754944e-38, %v341
  %v343 = vsel %vm340, %v342, %v338
  %v344 = vmul.f32 1.0, %v343
  %v345 = vmul.f32 %v344, 2.0
  %v346 = vsub.f32 %v345, 1.0
  %v347 = vmul.f32 %v344, %v182
  %349 = vrot.lane.b32.xlu0 %v346, 64
  %v350 = vpop.permute.xlu0 %349
  %v352 = vmul.f32 %v344, %v350
  %354 = vrot.lane.b32.xlu0 %v352, 32
  %v355 = vpop.permute.xlu0 %354
  %v357 = vadd.f32 %v347, %v355
  %v358 = vtanh.pop %v357
  %360 = vrot.lane.b32.xlu0 %v358, 64
  %v361 = vpop.permute.xlu0 %360
  %v363 = vmul.f32 %v344, %v361
  %v364 = vpack.c.bf16 %v363, %v363
  %366 = vrot.lane.b32.xlu0 %v364, 32
  %v367 = vpop.permute.xlu0 %366
  %v369 = vsel %vm82, %v367, 0
  %371 = vmatpush.bf16.msra.mxu0 0
  %372 = vmatpush.bf16.msra.mxu0 0
  %373 = vmatpush.bf16.msra.mxu0 0
  %374 = vmatpush.bf16.msra.mxu0 0
  %375 = vmatpush.bf16.msra.mxu0 0
  %376 = vmatpush.bf16.msra.mxu0 0
  %377 = vmatpush.bf16.msra.mxu0 %v207
  %378 = vmatpush.bf16.msra.mxu0 %v205
  %379 = vmatmul.bf16.gmra.mxu0 %v369
  %v380 = vpop.f32.mrf.mxu0
  %v381 = vadd.f32 0.0, %v380
  %v382 = vpop.f32.mrf.mxu0
  %383 = vdwg.mxu0
  %384 = vmatpush.bf16.msra.mxu0 0
  %385 = vmatpush.bf16.msra.mxu0 0
  %386 = vmatpush.bf16.msra.mxu0 0
  %387 = vmatpush.bf16.msra.mxu0 0
  %388 = vmatpush.bf16.msra.mxu0 0
  %389 = vmatpush.bf16.msra.mxu0 0
  %390 = vmatpush.bf16.msra.mxu0 %v208
  %391 = vmatpush.bf16.msra.mxu0 %v206
  %392 = vmatmul.bf16.gmra.mxu0 %v369
  %v393 = vpop.f32.mrf.mxu0
  %v394 = vadd.f32 0.0, %v393
  %v395 = vpop.f32.mrf.mxu0
  %396 = vdwg.mxu0
  %v397 = vpack.c.bf16 %v317, %v317
  %399 = vrot.lane.b32.xlu0 %v397, 32
  %v400 = vpop.permute.xlu0 %399
  %v402 = vsel %vm82, %v400, 0
  %404 = vmatpush.bf16.msra.mxu0 0
  %405 = vmatpush.bf16.msra.mxu0 0
  %406 = vmatpush.bf16.msra.mxu0 0
  %407 = vmatpush.bf16.msra.mxu0 0
  %408 = vmatpush.bf16.msra.mxu0 0
  %409 = vmatpush.bf16.msra.mxu0 0
  %410 = vmatpush.bf16.msra.mxu0 %v252
  %411 = vmatpush.bf16.msra.mxu0 %v251
  %412 = vmatmul.bf16.gmra.mxu0 %v402
  %v413 = vpop.f32.mrf.mxu0
  %v414 = vadd.f32 0.0, %v413
  %v415 = vpop.f32.mrf.mxu0
  %416 = vdwg.mxu0
  %v417 = vadd.f32 %v394, %v414
  %v418 = vadd.f32 %v417, %v273
  %v419 = vxor.u32 %v418, 2147483648
  %v420 = vmul.f32 %v419, 1.442695
  %v421 = vpow.pop %v420
  %v422 = vadd.f32 %v421, 1.0
  %v423 = vrcp.pop %v422
  %v424 = vmul.f32 %v422, %v423
  %v425 = vsub.f32 1.0, %v424
  %v426 = vmul.f32 %v423, %v425
  %v427 = vadd.f32 %v423, %v426
  %vm428 = vweird.f32 %v422
  %vm429 = vweird.f32 %v423
  %vm430 = vmor %vm428, %vm429
  %v431 = vsel %vm430, %v423, %v427
  %v432 = vand.u32 2147483647, %v422
  %vm433 = vcmp.eq.f32.partialorder %v432, 8.507059e+37
  %v434 = vand.u32 %v422, 2147483648
  %v435 = vor.u32 1.1754944e-38, %v434
  %v436 = vsel %vm433, %v435, %v431
  %v437 = vmul.f32 1.0, %v436
  %v438 = vmul.f32 %v437, 2.0
  %v439 = vsub.f32 %v438, 1.0
  %v440 = vmul.f32 %v437, %v311
  %442 = vrot.lane.b32.xlu0 %v439, 64
  %v443 = vpop.permute.xlu0 %442
  %v445 = vmul.f32 %v437, %v443
  %447 = vrot.lane.b32.xlu0 %v445, 32
  %v448 = vpop.permute.xlu0 %447
  %v450 = vadd.f32 %v440, %v448
  %v451 = vtanh.pop %v450
  %453 = vrot.lane.b32.xlu0 %v451, 64
  %v454 = vpop.permute.xlu0 %453
  %v456 = vmul.f32 %v437, %v454
  %458 = vrot.lane.b32.xlu0 %v456, 32
  %v459 = vpop.permute.xlu0 %458
  %s461 = scalar_lea.vmem %s6, 8
  %462 = vst.msk [vmem:[%s461] sm:$0xff] %vm82, %v459
  %s463 = scalar_lea.vmem [#allocation2], 16
  %v464 = vld [vmem:[%s463] sm:$0xff]
  %v465 = vadd.f32 %v464, %v381
  %v466 = vxor.u32 %v465, 2147483648
  %v467 = vmul.f32 %v466, 1.442695
  %v468 = vpow.pop %v467
  %v469 = vadd.f32 %v468, 1.0
  %v470 = vrcp.pop %v469
  %v471 = vmul.f32 %v469, %v470
  %v472 = vsub.f32 1.0, %v471
  %v473 = vmul.f32 %v470, %v472
  %v474 = vadd.f32 %v470, %v473
  %vm475 = vweird.f32 %v469
  %vm476 = vweird.f32 %v470
  %vm477 = vmor %vm475, %vm476
  %v478 = vsel %vm477, %v470, %v474
  %v479 = vand.u32 2147483647, %v469
  %vm480 = vcmp.eq.f32.partialorder %v479, 8.507059e+37
  %v481 = vand.u32 %v469, 2147483648
  %v482 = vor.u32 1.1754944e-38, %v481
  %v483 = vsel %vm480, %v482, %v478
  %v484 = vmul.f32 1.0, %v483
  %v485 = vmul.f32 %v484, 2.0
  %v486 = vsub.f32 %v485, 1.0
  %v487 = vmul.f32 %v484, %v357
  %489 = vrot.lane.b32.xlu0 %v486, 64
  %v490 = vpop.permute.xlu0 %489
  %v492 = vmul.f32 %v484, %v490
  %494 = vrot.lane.b32.xlu0 %v492, 32
  %v495 = vpop.permute.xlu0 %494
  %v497 = vadd.f32 %v487, %v495
  %v498 = vtanh.pop %v497
  %500 = vrot.lane.b32.xlu0 %v498, 64
  %v501 = vpop.permute.xlu0 %500
  %v503 = vmul.f32 %v484, %v501
  %v504 = vpack.c.bf16 %v503, %v503
  %506 = vrot.lane.b32.xlu0 %v504, 32
  %v507 = vpop.permute.xlu0 %506
  %v509 = vsel %vm82, %v507, 0
  %511 = vmatpush.bf16.msra.mxu0 0
  %512 = vmatpush.bf16.msra.mxu0 0
  %513 = vmatpush.bf16.msra.mxu0 0
  %514 = vmatpush.bf16.msra.mxu0 0
  %515 = vmatpush.bf16.msra.mxu0 0
  %516 = vmatpush.bf16.msra.mxu0 0
  %517 = vmatpush.bf16.msra.mxu0 %v207
  %518 = vmatpush.bf16.msra.mxu0 %v205
  %519 = vmatmul.bf16.gmra.mxu0 %v509
  %v520 = vpop.f32.mrf.mxu0
  %v521 = vadd.f32 0.0, %v520
  %v522 = vpop.f32.mrf.mxu0
  %523 = vdwg.mxu0
  %524 = vmatpush.bf16.msra.mxu0 0
  %525 = vmatpush.bf16.msra.mxu0 0
  %526 = vmatpush.bf16.msra.mxu0 0
  %527 = vmatpush.bf16.msra.mxu0 0
  %528 = vmatpush.bf16.msra.mxu0 0
  %529 = vmatpush.bf16.msra.mxu0 0
  %530 = vmatpush.bf16.msra.mxu0 %v208
  %531 = vmatpush.bf16.msra.mxu0 %v206
  %532 = vmatmul.bf16.gmra.mxu0 %v509
  %v533 = vpop.f32.mrf.mxu0
  %v534 = vadd.f32 0.0, %v533
  %v535 = vpop.f32.mrf.mxu0
  %536 = vdwg.mxu0
  %v537 = vpack.c.bf16 %v456, %v456
  %539 = vrot.lane.b32.xlu0 %v537, 32
  %v540 = vpop.permute.xlu0 %539
  %v542 = vsel %vm82, %v540, 0
  %544 = vmatpush.bf16.msra.mxu0 0
  %545 = vmatpush.bf16.msra.mxu0 0
  %546 = vmatpush.bf16.msra.mxu0 0
  %547 = vmatpush.bf16.msra.mxu0 0
  %548 = vmatpush.bf16.msra.mxu0 0
  %549 = vmatpush.bf16.msra.mxu0 0
  %550 = vmatpush.bf16.msra.mxu0 %v252
  %551 = vmatpush.bf16.msra.mxu0 %v251
  %552 = vmatmul.bf16.gmra.mxu0 %v542
  %v553 = vpop.f32.mrf.mxu0
  %v554 = vadd.f32 0.0, %v553
  %v555 = vpop.f32.mrf.mxu0
  %556 = vdwg.mxu0
  %v557 = vadd.f32 %v534, %v554
  %v558 = vadd.f32 %v557, %v273
  %v559 = vxor.u32 %v558, 2147483648
  %v560 = vmul.f32 %v559, 1.442695
  %v561 = vpow.pop %v560
  %v562 = vadd.f32 %v561, 1.0
  %v563 = vrcp.pop %v562
  %v564 = vmul.f32 %v562, %v563
  %v565 = vsub.f32 1.0, %v564
  %v566 = vmul.f32 %v563, %v565
  %v567 = vadd.f32 %v563, %v566
  %vm568 = vweird.f32 %v562
  %vm569 = vweird.f32 %v563
  %vm570 = vmor %vm568, %vm569
  %v571 = vsel %vm570, %v563, %v567
  %v572 = vand.u32 2147483647, %v562
  %vm573 = vcmp.eq.f32.partialorder %v572, 8.507059e+37
  %v574 = vand.u32 %v562, 2147483648
  %v575 = vor.u32 1.1754944e-38, %v574
  %v576 = vsel %vm573, %v575, %v571
  %v577 = vmul.f32 1.0, %v576
  %v578 = vmul.f32 %v577, 2.0
  %v579 = vsub.f32 %v578, 1.0
  %v580 = vmul.f32 %v577, %v450
  %582 = vrot.lane.b32.xlu0 %v579, 64
  %v583 = vpop.permute.xlu0 %582
  %v585 = vmul.f32 %v577, %v583
  %587 = vrot.lane.b32.xlu0 %v585, 32
  %v588 = vpop.permute.xlu0 %587
  %v590 = vadd.f32 %v580, %v588
  %v591 = vtanh.pop %v590
  %593 = vrot.lane.b32.xlu0 %v591, 64
  %v594 = vpop.permute.xlu0 %593
  %v596 = vmul.f32 %v577, %v594
  %598 = vrot.lane.b32.xlu0 %v596, 32
  %v599 = vpop.permute.xlu0 %598
  %s601 = scalar_lea.vmem %s6, 16
  %602 = vst.msk [vmem:[%s601] sm:$0xff] %vm82, %v599
  %s603 = scalar_lea.vmem [#allocation2], 24
  %v604 = vld [vmem:[%s603] sm:$0xff]
  %v605 = vadd.f32 %v604, %v521
  %v606 = vxor.u32 %v605, 2147483648
  %v607 = vmul.f32 %v606, 1.442695
  %v608 = vpow.pop %v607
  %v609 = vadd.f32 %v608, 1.0
  %v610 = vrcp.pop %v609
  %v611 = vmul.f32 %v609, %v610
  %v612 = vsub.f32 1.0, %v611
  %v613 = vmul.f32 %v610, %v612
  %v614 = vadd.f32 %v610, %v613
  %vm615 = vweird.f32 %v609
  %vm616 = vweird.f32 %v610
  %vm617 = vmor %vm615, %vm616
  %v618 = vsel %vm617, %v610, %v614
  %v619 = vand.u32 2147483647, %v609
  %vm620 = vcmp.eq.f32.partialorder %v619, 8.507059e+37
  %v621 = vand.u32 %v609, 2147483648
  %v622 = vor.u32 1.1754944e-38, %v621
  %v623 = vsel %vm620, %v622, %v618
  %v624 = vmul.f32 1.0, %v623
  %v625 = vmul.f32 %v624, 2.0
  %v626 = vsub.f32 %v625, 1.0
  %v627 = vmul.f32 %v624, %v497
  %629 = vrot.lane.b32.xlu0 %v626, 64
  %v630 = vpop.permute.xlu0 %629
  %v632 = vmul.f32 %v624, %v630
  %634 = vrot.lane.b32.xlu0 %v632, 32
  %v635 = vpop.permute.xlu0 %634
  %v637 = vadd.f32 %v627, %v635
  %v638 = vtanh.pop %v637
  %640 = vrot.lane.b32.xlu0 %v638, 64
  %v641 = vpop.permute.xlu0 %640
  %v643 = vmul.f32 %v624, %v641
  %v644 = vpack.c.bf16 %v643, %v643
  %646 = vrot.lane.b32.xlu0 %v644, 32
  %v647 = vpop.permute.xlu0 %646
  %v649 = vsel %vm82, %v647, 0
  %651 = vmatpush.bf16.msra.mxu0 0
  %652 = vmatpush.bf16.msra.mxu0 0
  %653 = vmatpush.bf16.msra.mxu0 0
  %654 = vmatpush.bf16.msra.mxu0 0
  %655 = vmatpush.bf16.msra.mxu0 0
  %656 = vmatpush.bf16.msra.mxu0 0
  %657 = vmatpush.bf16.msra.mxu0 %v207
  %658 = vmatpush.bf16.msra.mxu0 %v205
  %659 = vmatmul.bf16.gmra.mxu0 %v649
  %v660 = vpop.f32.mrf.mxu0
  %v661 = vadd.f32 0.0, %v660
  %v662 = vpop.f32.mrf.mxu0
  %663 = vdwg.mxu0
  %664 = vmatpush.bf16.msra.mxu0 0
  %665 = vmatpush.bf16.msra.mxu0 0
  %666 = vmatpush.bf16.msra.mxu0 0
  %667 = vmatpush.bf16.msra.mxu0 0
  %668 = vmatpush.bf16.msra.mxu0 0
  %669 = vmatpush.bf16.msra.mxu0 0
  %670 = vmatpush.bf16.msra.mxu0 %v208
  %671 = vmatpush.bf16.msra.mxu0 %v206
  %672 = vmatmul.bf16.gmra.mxu0 %v649
  %v673 = vpop.f32.mrf.mxu0
  %v674 = vadd.f32 0.0, %v673
  %v675 = vpop.f32.mrf.mxu0
  %676 = vdwg.mxu0
  %v677 = vpack.c.bf16 %v596, %v596
  %679 = vrot.lane.b32.xlu0 %v677, 32
  %v680 = vpop.permute.xlu0 %679
  %v682 = vsel %vm82, %v680, 0
  %684 = vmatpush.bf16.msra.mxu0 0
  %685 = vmatpush.bf16.msra.mxu0 0
  %686 = vmatpush.bf16.msra.mxu0 0
  %687 = vmatpush.bf16.msra.mxu0 0
  %688 = vmatpush.bf16.msra.mxu0 0
  %689 = vmatpush.bf16.msra.mxu0 0
  %690 = vmatpush.bf16.msra.mxu0 %v252
  %691 = vmatpush.bf16.msra.mxu0 %v251
  %692 = vmatmul.bf16.gmra.mxu0 %v682
  %v693 = vpop.f32.mrf.mxu0
  %v694 = vadd.f32 0.0, %v693
  %v695 = vpop.f32.mrf.mxu0
  %696 = vdwg.mxu0
  %v697 = vadd.f32 %v674, %v694
  %v698 = vadd.f32 %v697, %v273
  %v699 = vxor.u32 %v698, 2147483648
  %v700 = vmul.f32 %v699, 1.442695
  %v701 = vpow.pop %v700
  %v702 = vadd.f32 %v701, 1.0
  %v703 = vrcp.pop %v702
  %v704 = vmul.f32 %v702, %v703
  %v705 = vsub.f32 1.0, %v704
  %v706 = vmul.f32 %v703, %v705
  %v707 = vadd.f32 %v703, %v706
  %vm708 = vweird.f32 %v702
  %vm709 = vweird.f32 %v703
  %vm710 = vmor %vm708, %vm709
  %v711 = vsel %vm710, %v703, %v707
  %v712 = vand.u32 2147483647, %v702
  %vm713 = vcmp.eq.f32.partialorder %v712, 8.507059e+37
  %v714 = vand.u32 %v702, 2147483648
  %v715 = vor.u32 1.1754944e-38, %v714
  %v716 = vsel %vm713, %v715, %v711
  %v717 = vmul.f32 1.0, %v716
  %v718 = vmul.f32 %v717, 2.0
  %v719 = vsub.f32 %v718, 1.0
  %v720 = vmul.f32 %v717, %v590
  %722 = vrot.lane.b32.xlu0 %v719, 64
  %v723 = vpop.permute.xlu0 %722
  %v725 = vmul.f32 %v717, %v723
  %727 = vrot.lane.b32.xlu0 %v725, 32
  %v728 = vpop.permute.xlu0 %727
  %v730 = vadd.f32 %v720, %v728
  %v731 = vtanh.pop %v730
  %733 = vrot.lane.b32.xlu0 %v731, 64
  %v734 = vpop.permute.xlu0 %733
  %v736 = vmul.f32 %v717, %v734
  %738 = vrot.lane.b32.xlu0 %v736, 32
  %v739 = vpop.permute.xlu0 %738
  %s741 = scalar_lea.vmem %s6, 24
  %742 = vst.msk [vmem:[%s741] sm:$0xff] %vm82, %v739
  %s743 = scalar_lea.vmem [#allocation2], 32
  %v744 = vld [vmem:[%s743] sm:$0xff]
  %v745 = vadd.f32 %v744, %v661
  %v746 = vxor.u32 %v745, 2147483648
  %v747 = vmul.f32 %v746, 1.442695
  %v748 = vpow.pop %v747
  %v749 = vadd.f32 %v748, 1.0
  %v750 = vrcp.pop %v749
  %v751 = vmul.f32 %v749, %v750
  %v752 = vsub.f32 1.0, %v751
  %v753 = vmul.f32 %v750, %v752
  %v754 = vadd.f32 %v750, %v753
  %vm755 = vweird.f32 %v749
  %vm756 = vweird.f32 %v750
  %vm757 = vmor %vm755, %vm756
  %v758 = vsel %vm757, %v750, %v754
  %v759 = vand.u32 2147483647, %v749
  %vm760 = vcmp.eq.f32.partialorder %v759, 8.507059e+37
  %v761 = vand.u32 %v749, 2147483648
  %v762 = vor.u32 1.1754944e-38, %v761
  %v763 = vsel %vm760, %v762, %v758
  %v764 = vmul.f32 1.0, %v763
  %v765 = vmul.f32 %v764, 2.0
  %v766 = vsub.f32 %v765, 1.0
  %v767 = vmul.f32 %v764, %v637
  %769 = vrot.lane.b32.xlu0 %v766, 64
  %v770 = vpop.permute.xlu0 %769
  %v772 = vmul.f32 %v764, %v770
  %774 = vrot.lane.b32.xlu0 %v772, 32
  %v775 = vpop.permute.xlu0 %774
  %v777 = vadd.f32 %v767, %v775
  %v778 = vtanh.pop %v777
  %780 = vrot.lane.b32.xlu0 %v778, 64
  %v781 = vpop.permute.xlu0 %780
  %v783 = vmul.f32 %v764, %v781
  %v784 = vpack.c.bf16 %v783, %v783
  %786 = vrot.lane.b32.xlu0 %v784, 32
  %v787 = vpop.permute.xlu0 %786
  %v789 = vsel %vm82, %v787, 0
  %791 = vmatpush.bf16.msra.mxu0 0
  %792 = vmatpush.bf16.msra.mxu0 0
  %793 = vmatpush.bf16.msra.mxu0 0
  %794 = vmatpush.bf16.msra.mxu0 0
  %795 = vmatpush.bf16.msra.mxu0 0
  %796 = vmatpush.bf16.msra.mxu0 0
  %797 = vmatpush.bf16.msra.mxu0 %v207
  %798 = vmatpush.bf16.msra.mxu0 %v205
  %799 = vmatmul.bf16.gmra.mxu0 %v789
  %v800 = vpop.f32.mrf.mxu0
  %v801 = vadd.f32 0.0, %v800
  %v802 = vpop.f32.mrf.mxu0
  %803 = vdwg.mxu0
  %804 = vmatpush.bf16.msra.mxu0 0
  %805 = vmatpush.bf16.msra.mxu0 0
  %806 = vmatpush.bf16.msra.mxu0 0
  %807 = vmatpush.bf16.msra.mxu0 0
  %808 = vmatpush.bf16.msra.mxu0 0
  %809 = vmatpush.bf16.msra.mxu0 0
  %810 = vmatpush.bf16.msra.mxu0 %v208
  %811 = vmatpush.bf16.msra.mxu0 %v206
  %812 = vmatmul.bf16.gmra.mxu0 %v789
  %v813 = vpop.f32.mrf.mxu0
  %v814 = vadd.f32 0.0, %v813
  %v815 = vpop.f32.mrf.mxu0
  %816 = vdwg.mxu0
  %v817 = vpack.c.bf16 %v736, %v736
  %819 = vrot.lane.b32.xlu0 %v817, 32
  %v820 = vpop.permute.xlu0 %819
  %v822 = vsel %vm82, %v820, 0
  %824 = vmatpush.bf16.msra.mxu0 0
  %825 = vmatpush.bf16.msra.mxu0 0
  %826 = vmatpush.bf16.msra.mxu0 0
  %827 = vmatpush.bf16.msra.mxu0 0
  %828 = vmatpush.bf16.msra.mxu0 0
  %829 = vmatpush.bf16.msra.mxu0 0
  %830 = vmatpush.bf16.msra.mxu0 %v252
  %831 = vmatpush.bf16.msra.mxu0 %v251
  %832 = vmatmul.bf16.gmra.mxu0 %v822
  %v833 = vpop.f32.mrf.mxu0
  %v834 = vadd.f32 0.0, %v833
  %v835 = vpop.f32.mrf.mxu0
  %836 = vdwg.mxu0
  %v837 = vadd.f32 %v814, %v834
  %v838 = vadd.f32 %v837, %v273
  %v839 = vxor.u32 %v838, 2147483648
  %v840 = vmul.f32 %v839, 1.442695
  %v841 = vpow.pop %v840
  %v842 = vadd.f32 %v841, 1.0
  %v843 = vrcp.pop %v842
  %v844 = vmul.f32 %v842, %v843
  %v845 = vsub.f32 1.0, %v844
  %v846 = vmul.f32 %v843, %v845
  %v847 = vadd.f32 %v843, %v846
  %vm848 = vweird.f32 %v842
  %vm849 = vweird.f32 %v843
  %vm850 = vmor %vm848, %vm849
  %v851 = vsel %vm850, %v843, %v847
  %v852 = vand.u32 2147483647, %v842
  %vm853 = vcmp.eq.f32.partialorder %v852, 8.507059e+37
  %v854 = vand.u32 %v842, 2147483648
  %v855 = vor.u32 1.1754944e-38, %v854
  %v856 = vsel %vm853, %v855, %v851
  %v857 = vmul.f32 1.0, %v856
  %v858 = vmul.f32 %v857, 2.0
  %v859 = vsub.f32 %v858, 1.0
  %v860 = vmul.f32 %v857, %v730
  %862 = vrot.lane.b32.xlu0 %v859, 64
  %v863 = vpop.permute.xlu0 %862
  %v865 = vmul.f32 %v857, %v863
  %867 = vrot.lane.b32.xlu0 %v865, 32
  %v868 = vpop.permute.xlu0 %867
  %v870 = vadd.f32 %v860, %v868
  %v871 = vtanh.pop %v870
  %873 = vrot.lane.b32.xlu0 %v871, 64
  %v874 = vpop.permute.xlu0 %873
  %v876 = vmul.f32 %v857, %v874
  %878 = vrot.lane.b32.xlu0 %v876, 32
  %v879 = vpop.permute.xlu0 %878
  %s881 = scalar_lea.vmem %s6, 32
  %882 = vst.msk [vmem:[%s881] sm:$0xff] %vm82, %v879
  %s883 = scalar_lea.vmem [#allocation2], 40
  %v884 = vld [vmem:[%s883] sm:$0xff]
  %v885 = vadd.f32 %v884, %v801
  %v886 = vxor.u32 %v885, 2147483648
  %v887 = vmul.f32 %v886, 1.442695
  %v888 = vpow.pop %v887
  %v889 = vadd.f32 %v888, 1.0
  %v890 = vrcp.pop %v889
  %v891 = vmul.f32 %v889, %v890
  %v892 = vsub.f32 1.0, %v891
  %v893 = vmul.f32 %v890, %v892
  %v894 = vadd.f32 %v890, %v893
  %vm895 = vweird.f32 %v889
  %vm896 = vweird.f32 %v890
  %vm897 = vmor %vm895, %vm896
  %v898 = vsel %vm897, %v890, %v894
  %v899 = vand.u32 2147483647, %v889
  %vm900 = vcmp.eq.f32.partialorder %v899, 8.507059e+37
  %v901 = vand.u32 %v889, 2147483648
  %v902 = vor.u32 1.1754944e-38, %v901
  %v903 = vsel %vm900, %v902, %v898
  %v904 = vmul.f32 1.0, %v903
  %v905 = vmul.f32 %v904, 2.0
  %v906 = vsub.f32 %v905, 1.0
  %v907 = vmul.f32 %v904, %v777
  %909 = vrot.lane.b32.xlu0 %v906, 64
  %v910 = vpop.permute.xlu0 %909
  %v912 = vmul.f32 %v904, %v910
  %914 = vrot.lane.b32.xlu0 %v912, 32
  %v915 = vpop.permute.xlu0 %914
  %v917 = vadd.f32 %v907, %v915
  %v918 = vtanh.pop %v917
  %920 = vrot.lane.b32.xlu0 %v918, 64
  %v921 = vpop.permute.xlu0 %920
  %v923 = vmul.f32 %v904, %v921
  %v924 = vpack.c.bf16 %v923, %v923
  %926 = vrot.lane.b32.xlu0 %v924, 32
  %v927 = vpop.permute.xlu0 %926
  %v929 = vsel %vm82, %v927, 0
  %931 = vmatpush.bf16.msra.mxu0 0
  %932 = vmatpush.bf16.msra.mxu0 0
  %933 = vmatpush.bf16.msra.mxu0 0
  %934 = vmatpush.bf16.msra.mxu0 0
  %935 = vmatpush.bf16.msra.mxu0 0
  %936 = vmatpush.bf16.msra.mxu0 0
  %937 = vmatpush.bf16.msra.mxu0 %v207
  %938 = vmatpush.bf16.msra.mxu0 %v205
  %939 = vmatmul.bf16.gmra.mxu0 %v929
  %v940 = vpop.f32.mrf.mxu0
  %v941 = vadd.f32 0.0, %v940
  %v942 = vpop.f32.mrf.mxu0
  %943 = vdwg.mxu0
  %944 = vmatpush.bf16.msra.mxu0 0
  %945 = vmatpush.bf16.msra.mxu0 0
  %946 = vmatpush.bf16.msra.mxu0 0
  %947 = vmatpush.bf16.msra.mxu0 0
  %948 = vmatpush.bf16.msra.mxu0 0
  %949 = vmatpush.bf16.msra.mxu0 0
  %950 = vmatpush.bf16.msra.mxu0 %v208
  %951 = vmatpush.bf16.msra.mxu0 %v206
  %952 = vmatmul.bf16.gmra.mxu0 %v929
  %v953 = vpop.f32.mrf.mxu0
  %v954 = vadd.f32 0.0, %v953
  %v955 = vpop.f32.mrf.mxu0
  %956 = vdwg.mxu0
  %v957 = vpack.c.bf16 %v876, %v876
  %959 = vrot.lane.b32.xlu0 %v957, 32
  %v960 = vpop.permute.xlu0 %959
  %v962 = vsel %vm82, %v960, 0
  %964 = vmatpush.bf16.msra.mxu0 0
  %965 = vmatpush.bf16.msra.mxu0 0
  %966 = vmatpush.bf16.msra.mxu0 0
  %967 = vmatpush.bf16.msra.mxu0 0
  %968 = vmatpush.bf16.msra.mxu0 0
  %969 = vmatpush.bf16.msra.mxu0 0
  %970 = vmatpush.bf16.msra.mxu0 %v252
  %971 = vmatpush.bf16.msra.mxu0 %v251
  %972 = vmatmul.bf16.gmra.mxu0 %v962
  %v973 = vpop.f32.mrf.mxu0
  %v974 = vadd.f32 0.0, %v973
  %v975 = vpop.f32.mrf.mxu0
  %976 = vdwg.mxu0
  %v977 = vadd.f32 %v954, %v974
  %v978 = vadd.f32 %v977, %v273
  %v979 = vxor.u32 %v978, 2147483648
  %v980 = vmul.f32 %v979, 1.442695
  %v981 = vpow.pop %v980
  %v982 = vadd.f32 %v981, 1.0
  %v983 = vrcp.pop %v982
  %v984 = vmul.f32 %v982, %v983
  %v985 = vsub.f32 1.0, %v984
  %v986 = vmul.f32 %v983, %v985
  %v987 = vadd.f32 %v983, %v986
  %vm988 = vweird.f32 %v982
  %vm989 = vweird.f32 %v983
  %vm990 = vmor %vm988, %vm989
  %v991 = vsel %vm990, %v983, %v987
  %v992 = vand.u32 2147483647, %v982
  %vm993 = vcmp.eq.f32.partialorder %v992, 8.507059e+37
  %v994 = vand.u32 %v982, 2147483648
  %v995 = vor.u32 1.1754944e-38, %v994
  %v996 = vsel %vm993, %v995, %v991
  %v997 = vmul.f32 1.0, %v996
  %v998 = vmul.f32 %v997, 2.0
  %v999 = vsub.f32 %v998, 1.0
  %v1000 = vmul.f32 %v997, %v870
  %1002 = vrot.lane.b32.xlu0 %v999, 64
  %v1003 = vpop.permute.xlu0 %1002
  %v1005 = vmul.f32 %v997, %v1003
  %1007 = vrot.lane.b32.xlu0 %v1005, 32
  %v1008 = vpop.permute.xlu0 %1007
  %v1010 = vadd.f32 %v1000, %v1008
  %v1011 = vtanh.pop %v1010
  %1013 = vrot.lane.b32.xlu0 %v1011, 64
  %v1014 = vpop.permute.xlu0 %1013
  %v1016 = vmul.f32 %v997, %v1014
  %1018 = vrot.lane.b32.xlu0 %v1016, 32
  %v1019 = vpop.permute.xlu0 %1018
  %s1021 = scalar_lea.vmem %s6, 40
  %1022 = vst.msk [vmem:[%s1021] sm:$0xff] %vm82, %v1019
  %s1023 = scalar_lea.vmem [#allocation2], 48
  %v1024 = vld [vmem:[%s1023] sm:$0xff]
  %v1025 = vadd.f32 %v1024, %v941
  %v1026 = vxor.u32 %v1025, 2147483648
  %v1027 = vmul.f32 %v1026, 1.442695
  %v1028 = vpow.pop %v1027
  %v1029 = vadd.f32 %v1028, 1.0
  %v1030 = vrcp.pop %v1029
  %v1031 = vmul.f32 %v1029, %v1030
  %v1032 = vsub.f32 1.0, %v1031
  %v1033 = vmul.f32 %v1030, %v1032
  %v1034 = vadd.f32 %v1030, %v1033
  %vm1035 = vweird.f32 %v1029
  %vm1036 = vweird.f32 %v1030
  %vm1037 = vmor %vm1035, %vm1036
  %v1038 = vsel %vm1037, %v1030, %v1034
  %v1039 = vand.u32 2147483647, %v1029
  %vm1040 = vcmp.eq.f32.partialorder %v1039, 8.507059e+37
  %v1041 = vand.u32 %v1029, 2147483648
  %v1042 = vor.u32 1.1754944e-38, %v1041
  %v1043 = vsel %vm1040, %v1042, %v1038
  %v1044 = vmul.f32 1.0, %v1043
  %v1045 = vmul.f32 %v1044, 2.0
  %v1046 = vsub.f32 %v1045, 1.0
  %v1047 = vmul.f32 %v1044, %v917
  %1049 = vrot.lane.b32.xlu0 %v1046, 64
  %v1050 = vpop.permute.xlu0 %1049
  %v1052 = vmul.f32 %v1044, %v1050
  %1054 = vrot.lane.b32.xlu0 %v1052, 32
  %v1055 = vpop.permute.xlu0 %1054
  %v1057 = vadd.f32 %v1047, %v1055
  %v1058 = vtanh.pop %v1057
  %1060 = vrot.lane.b32.xlu0 %v1058, 64
  %v1061 = vpop.permute.xlu0 %1060
  %v1063 = vmul.f32 %v1044, %v1061
  %v1064 = vpack.c.bf16 %v1063, %v1063
  %1066 = vrot.lane.b32.xlu0 %v1064, 32
  %v1067 = vpop.permute.xlu0 %1066
  %v1069 = vsel %vm82, %v1067, 0
  %1071 = vmatpush.bf16.msra.mxu0 0
  %1072 = vmatpush.bf16.msra.mxu0 0
  %1073 = vmatpush.bf16.msra.mxu0 0
  %1074 = vmatpush.bf16.msra.mxu0 0
  %1075 = vmatpush.bf16.msra.mxu0 0
  %1076 = vmatpush.bf16.msra.mxu0 0
  %1077 = vmatpush.bf16.msra.mxu0 %v207
  %1078 = vmatpush.bf16.msra.mxu0 %v205
  %1079 = vmatmul.bf16.gmra.mxu0 %v1069
  %v1080 = vpop.f32.mrf.mxu0
  %v1081 = vadd.f32 0.0, %v1080
  %v1082 = vpop.f32.mrf.mxu0
  %1083 = vdwg.mxu0
  %1084 = vmatpush.bf16.msra.mxu0 0
  %1085 = vmatpush.bf16.msra.mxu0 0
  %1086 = vmatpush.bf16.msra.mxu0 0
  %1087 = vmatpush.bf16.msra.mxu0 0
  %1088 = vmatpush.bf16.msra.mxu0 0
  %1089 = vmatpush.bf16.msra.mxu0 0
  %1090 = vmatpush.bf16.msra.mxu0 %v208
  %1091 = vmatpush.bf16.msra.mxu0 %v206
  %1092 = vmatmul.bf16.gmra.mxu0 %v1069
  %v1093 = vpop.f32.mrf.mxu0
  %v1094 = vadd.f32 0.0, %v1093
  %v1095 = vpop.f32.mrf.mxu0
  %1096 = vdwg.mxu0
  %v1097 = vpack.c.bf16 %v1016, %v1016
  %1099 = vrot.lane.b32.xlu0 %v1097, 32
  %v1100 = vpop.permute.xlu0 %1099
  %v1102 = vsel %vm82, %v1100, 0
  %1104 = vmatpush.bf16.msra.mxu0 0
  %1105 = vmatpush.bf16.msra.mxu0 0
  %1106 = vmatpush.bf16.msra.mxu0 0
  %1107 = vmatpush.bf16.msra.mxu0 0
  %1108 = vmatpush.bf16.msra.mxu0 0
  %1109 = vmatpush.bf16.msra.mxu0 0
  %1110 = vmatpush.bf16.msra.mxu0 %v252
  %1111 = vmatpush.bf16.msra.mxu0 %v251
  %1112 = vmatmul.bf16.gmra.mxu0 %v1102
  %v1113 = vpop.f32.mrf.mxu0
  %v1114 = vadd.f32 0.0, %v1113
  %v1115 = vpop.f32.mrf.mxu0
  %1116 = vdwg.mxu0
  %v1117 = vadd.f32 %v1094, %v1114
  %v1118 = vadd.f32 %v1117, %v273
  %v1119 = vxor.u32 %v1118, 2147483648
  %v1120 = vmul.f32 %v1119, 1.442695
  %v1121 = vpow.pop %v1120
  %v1122 = vadd.f32 %v1121, 1.0
  %v1123 = vrcp.pop %v1122
  %v1124 = vmul.f32 %v1122, %v1123
  %v1125 = vsub.f32 1.0, %v1124
  %v1126 = vmul.f32 %v1123, %v1125
  %v1127 = vadd.f32 %v1123, %v1126
  %vm1128 = vweird.f32 %v1122
  %vm1129 = vweird.f32 %v1123
  %vm1130 = vmor %vm1128, %vm1129
  %v1131 = vsel %vm1130, %v1123, %v1127
  %v1132 = vand.u32 2147483647, %v1122
  %vm1133 = vcmp.eq.f32.partialorder %v1132, 8.507059e+37
  %v1134 = vand.u32 %v1122, 2147483648
  %v1135 = vor.u32 1.1754944e-38, %v1134
  %v1136 = vsel %vm1133, %v1135, %v1131
  %v1137 = vmul.f32 1.0, %v1136
  %v1138 = vmul.f32 %v1137, 2.0
  %v1139 = vsub.f32 %v1138, 1.0
  %v1140 = vmul.f32 %v1137, %v1010
  %1142 = vrot.lane.b32.xlu0 %v1139, 64
  %v1143 = vpop.permute.xlu0 %1142
  %v1145 = vmul.f32 %v1137, %v1143
  %1147 = vrot.lane.b32.xlu0 %v1145, 32
  %v1148 = vpop.permute.xlu0 %1147
  %v1150 = vadd.f32 %v1140, %v1148
  %v1151 = vtanh.pop %v1150
  %1153 = vrot.lane.b32.xlu0 %v1151, 64
  %v1154 = vpop.permute.xlu0 %1153
  %v1156 = vmul.f32 %v1137, %v1154
  %1158 = vrot.lane.b32.xlu0 %v1156, 32
  %v1159 = vpop.permute.xlu0 %1158
  %s1161 = scalar_lea.vmem %s6, 48
  %1162 = vst.msk [vmem:[%s1161] sm:$0xff] %vm82, %v1159
  %s1163 = scalar_lea.vmem [#allocation2], 56
  %v1164 = vld [vmem:[%s1163] sm:$0xff]
  %v1165 = vadd.f32 %v1164, %v1081
  %v1166 = vxor.u32 %v1165, 2147483648
  %v1167 = vmul.f32 %v1166, 1.442695
  %v1168 = vpow.pop %v1167
  %v1169 = vadd.f32 %v1168, 1.0
  %v1170 = vrcp.pop %v1169
  %v1171 = vmul.f32 %v1169, %v1170
  %v1172 = vsub.f32 1.0, %v1171
  %v1173 = vmul.f32 %v1170, %v1172
  %v1174 = vadd.f32 %v1170, %v1173
  %vm1175 = vweird.f32 %v1169
  %vm1176 = vweird.f32 %v1170
  %vm1177 = vmor %vm1175, %vm1176
  %v1178 = vsel %vm1177, %v1170, %v1174
  %v1179 = vand.u32 2147483647, %v1169
  %vm1180 = vcmp.eq.f32.partialorder %v1179, 8.507059e+37
  %v1181 = vand.u32 %v1169, 2147483648
  %v1182 = vor.u32 1.1754944e-38, %v1181
  %v1183 = vsel %vm1180, %v1182, %v1178
  %v1184 = vmul.f32 1.0, %v1183
  %v1185 = vmul.f32 %v1184, 2.0
  %v1186 = vsub.f32 %v1185, 1.0
  %v1187 = vmul.f32 %v1184, %v1057
  %1189 = vrot.lane.b32.xlu0 %v1186, 64
  %v1190 = vpop.permute.xlu0 %1189
  %v1192 = vmul.f32 %v1184, %v1190
  %1194 = vrot.lane.b32.xlu0 %v1192, 32
  %v1195 = vpop.permute.xlu0 %1194
  %v1197 = vadd.f32 %v1187, %v1195
  %v1198 = vtanh.pop %v1197
  %1200 = vrot.lane.b32.xlu0 %v1198, 64
  %v1201 = vpop.permute.xlu0 %1200
  %v1203 = vmul.f32 %v1184, %v1201
  %v1204 = vpack.c.bf16 %v1203, %v1203
  %1206 = vrot.lane.b32.xlu0 %v1204, 32
  %v1207 = vpop.permute.xlu0 %1206
  %v1209 = vsel %vm82, %v1207, 0
  %1211 = vmatpush.bf16.msra.mxu0 0
  %1212 = vmatpush.bf16.msra.mxu0 0
  %1213 = vmatpush.bf16.msra.mxu0 0
  %1214 = vmatpush.bf16.msra.mxu0 0
  %1215 = vmatpush.bf16.msra.mxu0 0
  %1216 = vmatpush.bf16.msra.mxu0 0
  %1217 = vmatpush.bf16.msra.mxu0 %v207
  %1218 = vmatpush.bf16.msra.mxu0 %v205
  %1219 = vmatmul.bf16.gmra.mxu0 %v1209
  %v1220 = vpop.f32.mrf.mxu0
  %v1221 = vadd.f32 0.0, %v1220
  %v1222 = vpop.f32.mrf.mxu0
  %1223 = vdwg.mxu0
  %1224 = vmatpush.bf16.msra.mxu0 0
  %1225 = vmatpush.bf16.msra.mxu0 0
  %1226 = vmatpush.bf16.msra.mxu0 0
  %1227 = vmatpush.bf16.msra.mxu0 0
  %1228 = vmatpush.bf16.msra.mxu0 0
  %1229 = vmatpush.bf16.msra.mxu0 0
  %1230 = vmatpush.bf16.msra.mxu0 %v208
  %1231 = vmatpush.bf16.msra.mxu0 %v206
  %1232 = vmatmul.bf16.gmra.mxu0 %v1209
  %v1233 = vpop.f32.mrf.mxu0
  %v1234 = vadd.f32 0.0, %v1233
  %v1235 = vpop.f32.mrf.mxu0
  %1236 = vdwg.mxu0
  %v1237 = vpack.c.bf16 %v1156, %v1156
  %1239 = vrot.lane.b32.xlu0 %v1237, 32
  %v1240 = vpop.permute.xlu0 %1239
  %v1242 = vsel %vm82, %v1240, 0
  %1244 = vmatpush.bf16.msra.mxu0 0
  %1245 = vmatpush.bf16.msra.mxu0 0
  %1246 = vmatpush.bf16.msra.mxu0 0
  %1247 = vmatpush.bf16.msra.mxu0 0
  %1248 = vmatpush.bf16.msra.mxu0 0
  %1249 = vmatpush.bf16.msra.mxu0 0
  %1250 = vmatpush.bf16.msra.mxu0 %v252
  %1251 = vmatpush.bf16.msra.mxu0 %v251
  %1252 = vmatmul.bf16.gmra.mxu0 %v1242
  %v1253 = vpop.f32.mrf.mxu0
  %v1254 = vadd.f32 0.0, %v1253
  %v1255 = vpop.f32.mrf.mxu0
  %1256 = vdwg.mxu0
  %v1257 = vadd.f32 %v1234, %v1254
  %v1258 = vadd.f32 %v1257, %v273
  %v1259 = vxor.u32 %v1258, 2147483648
  %v1260 = vmul.f32 %v1259, 1.442695
  %v1261 = vpow.pop %v1260
  %v1262 = vadd.f32 %v1261, 1.0
  %v1263 = vrcp.pop %v1262
  %v1264 = vmul.f32 %v1262, %v1263
  %v1265 = vsub.f32 1.0, %v1264
  %v1266 = vmul.f32 %v1263, %v1265
  %v1267 = vadd.f32 %v1263, %v1266
  %vm1268 = vweird.f32 %v1262
  %vm1269 = vweird.f32 %v1263
  %vm1270 = vmor %vm1268, %vm1269
  %v1271 = vsel %vm1270, %v1263, %v1267
  %v1272 = vand.u32 2147483647, %v1262
  %vm1273 = vcmp.eq.f32.partialorder %v1272, 8.507059e+37
  %v1274 = vand.u32 %v1262, 2147483648
  %v1275 = vor.u32 1.1754944e-38, %v1274
  %v1276 = vsel %vm1273, %v1275, %v1271
  %v1277 = vmul.f32 1.0, %v1276
  %v1278 = vmul.f32 %v1277, 2.0
  %v1279 = vsub.f32 %v1278, 1.0
  %v1280 = vmul.f32 %v1277, %v1150
  %1282 = vrot.lane.b32.xlu0 %v1279, 64
  %v1283 = vpop.permute.xlu0 %1282
  %v1285 = vmul.f32 %v1277, %v1283
  %1287 = vrot.lane.b32.xlu0 %v1285, 32
  %v1288 = vpop.permute.xlu0 %1287
  %v1290 = vadd.f32 %v1280, %v1288
  %v1291 = vtanh.pop %v1290
  %1293 = vrot.lane.b32.xlu0 %v1291, 64
  %v1294 = vpop.permute.xlu0 %1293
  %v1296 = vmul.f32 %v1277, %v1294
  %1298 = vrot.lane.b32.xlu0 %v1296, 32
  %v1299 = vpop.permute.xlu0 %1298
  %s1301 = scalar_lea.vmem %s6, 56
  %1302 = vst.msk [vmem:[%s1301] sm:$0xff] %vm82, %v1299
  %1304 = vrot.lane.b32.xlu0 %v1203, 32
  %v1305 = vpop.permute.xlu0 %1304
  %1307 = vst.msk [vmem:[#allocation4] sm:$0xff] %vm82, %v1305
  %1309 = vrot.lane.b32.xlu0 %v1197, 96
  %v1310 = vpop.permute.xlu0 %1309
  %1312 = vst.msk [vmem:[#allocation5] sm:$0xff] %vm82, %v1310
  %1313 = vst.msk [vmem:[#allocation6] sm:$0xff] %vm82, %v1299
  %1315 = vrot.lane.b32.xlu0 %v1290, 96
  %v1316 = vpop.permute.xlu0 %1315
  %1318 = vst.msk [vmem:[#allocation7] sm:$0xff] %vm82, %v1316
  %1319 = vst [vmem:[#allocation3] sm:$0xff] %v1221
  // Predicated region
  $region30: #{lstm_layer_forward.1} parent=0 // pred_check
    _
  $region31: #{lstm_layer_forward.1} parent=0 // pred_check_branch
    %1321 = sbr.rel (0) target = $region33
  $region32: #{lstm_layer_forward.1} parent=0 // pred_region
    _
  $region33: #{lstm_layer_forward.1} parent=0 // pred_fallthru
    _
  // Predicated region
  $region34: #{lstm_layer_forward.1} parent=0 // pred_check
    _
  $region35: #{lstm_layer_forward.1} parent=0 // pred_check_branch
    %1323 = sbr.rel (0) target = $region37
  $region36: #{lstm_layer_forward.1} parent=0 // pred_region
    _
  $region37: #{lstm_layer_forward.1} parent=0 // pred_fallthru
    _

</llo_original>
